<compile_context>
chip_gen: v6e
topology: v6e:2x2x1
jax: 0.10.0
libtpu: 0.0.40
codegen_flags: <defaults>
</compile_context>

<pallas_src>
import functools

import jax
import jax.numpy as jnp
from jax.experimental import pallas as pl
from jax.experimental.pallas import tpu as pltpu


def _round_up(x, m):
    return ((x + m - 1) // m) * m


def petnet_kernel(img_ref, dense_ref, rowsel_ref, cw_ref,
                  w_head_ref, b_head_ref,
                  w1e_ref, w1d_ref, b1_ref,
                  w2_ref, b2_ref,
                  out_ref, *, n_q, inv_patches):
    # img_ref: (C*H, W) f32 -- the raw image for this batch row.
    x = img_ref[...]

    # ---- strided row reduction on the MXU ---------------------------------
    # partial[q=(c,dy), w] = sum_{h : h % p == dy} image[c, h, w]
    partial = jnp.dot(rowsel_ref[...], x,
                      preferred_element_type=jnp.float32)        # (n_q, W)

    # ---- column fold fused with the patch-embedding ------------------------
    # feat[f] = sum_q sum_w partial[q, w] * w_pe[q*p + w%p, f]
    # Unrolled tiny matvecs (n_q == C*p == 12): no reshapes, no narrow stores.
    n_feat = cw_ref.shape[2]
    feat = jnp.zeros((1, n_feat), jnp.float32)
    for q in range(n_q):
        feat = feat + jnp.dot(partial[q:q + 1, :], cw_ref[q],
                              preferred_element_type=jnp.float32)
    feat = feat * inv_patches                                    # (1, F) mean-pooled embed

    # ---- self.model.head = nn.Linear(n_features, 128) ----------------------
    emb = (jnp.dot(feat, w_head_ref[...],
                   preferred_element_type=jnp.float32)
           + b_head_ref[...])                                    # (1, 128)

    # ---- dropout -> identity at inference; cat([emb, dense]) @ W1 as a
    #      split matmul (lane-dense, no concat) ------------------------------
    h = (jnp.dot(emb, w1e_ref[...], preferred_element_type=jnp.float32)
         + jnp.dot(dense_ref[...], w1d_ref[...],
                   preferred_element_type=jnp.float32)
         + b1_ref[...])                                          # (1, 64)
    h = jnp.maximum(h, 0.0)                                      # ReLU

    # ---- fc[2] = nn.Linear(64, out_features) (cols zero-padded to 128) -----
    out_ref[...] = (jnp.dot(h, w2_ref[...],
                            preferred_element_type=jnp.float32)
                    + b2_ref[...])                               # (1, out_pad)


def petnet_forward(image, dense, params):
    """image: (B, C, H, W) float32 (NCHW as in PyTorch); dense: (B, num_dense)."""
    B, C, H, W = image.shape
    p = params['patch']
    assert H % p == 0 and W % p == 0, (H, W, p)
    Ph, Pw = H // p, W // p
    F = params['w_pe'].shape[1]
    nd = dense.shape[1]
    nd_pad = _round_up(nd, 128)
    out_f = params['out_features']
    out_pad = _round_up(out_f, 128)
    n_q = C * p

    # Raw image straight into the kernel: a pure (free) reshape, no transpose,
    # no pad, no dtype cast, no extra HBM round trip.
    img = image.reshape(B, C * H, W)

    # Row-selection matrix: rowsel[c*p+dy, c*H+h] = 1 iff h % p == dy.
    r = jnp.arange(C * H)
    c_of, dy_of = r // H, (r % H) % p
    q_idx = jnp.arange(n_q)
    rowsel = ((q_idx[:, None] // p == c_of[None, :]) &
              (q_idx[:, None] % p == dy_of[None, :])).astype(jnp.float32)  # (n_q, C*H)

    # Column-fold + patch-embedding fused weight: cw[q, w, f] = w_pe[q*p + w%p, f].
    dx_of = jnp.arange(W) % p
    cw = params['w_pe'][q_idx[:, None] * p + dx_of[None, :]]               # (n_q, W, F)

    dense_p = jnp.pad(dense.astype(jnp.float32),
                      ((0, 0), (0, nd_pad - nd))).reshape(B, 1, nd_pad)
    w1d_p = jnp.pad(params['w1_dense'], ((0, nd_pad - nd), (0, 0)))        # (nd_pad, 64)
    w2_p = jnp.pad(params['w2'], ((0, 0), (0, out_pad - out_f)))           # (64, out_pad)
    b2_p = jnp.pad(params['b2'], ((0, 0), (0, out_pad - out_f)))           # (1, out_pad)

    # Small weights: whole-array VMEM blocks, resident across the grid.
    full = lambda a: pl.BlockSpec(a.shape, lambda b, _n=a.ndim: (0,) * _n)

    grid_spec = pltpu.PrefetchScalarGridSpec(
        num_scalar_prefetch=0,
        grid=(B,),
        in_specs=[
            # whole image for this batch row (double-buffered across b)
            pl.BlockSpec((pl.Squeezed(), C * H, W), lambda b: (b, 0, 0)),
            # dense row for this batch element (lane-padded)
            pl.BlockSpec((pl.Squeezed(), 1, nd_pad), lambda b: (b, 0, 0)),
            full(rowsel),
            full(cw),
            full(params['w_head']),
            full(params['b_head']),
            full(params['w1_emb']),
            full(w1d_p),
            full(params['b1']),
            full(w2_p),
            full(b2_p),
        ],
        out_specs=pl.BlockSpec((pl.Squeezed(), 1, out_pad),
                               lambda b: (b, 0, 0)),
    )

    out = pl.pallas_call(
        functools.partial(petnet_kernel, n_q=n_q, inv_patches=1.0 / (Ph * Pw)),
        out_shape=jax.ShapeDtypeStruct((B, 1, out_pad), jnp.float32),
        grid_spec=grid_spec,
        compiler_params=pltpu.CompilerParams(
            dimension_semantics=("parallel",)),
    )(img, dense_p, rowsel, cw,
      params['w_head'], params['b_head'],
      params['w1_emb'], w1d_p, params['b1'], w2_p, b2_p)

    return out.reshape(B, out_pad)[:, :out_f]


def petnet_reference(image, dense, params):
    """Pure-JAX f32 reference."""
    B, C, H, W = image.shape
    p = params['patch']
    Ph, Pw = H // p, W // p
    patches = image.reshape(B, C, Ph, p, Pw, p)
    patches = patches.transpose(0, 2, 4, 1, 3, 5).reshape(B, Ph * Pw, C * p * p)
    # mean-then-embed == embed-then-mean (linearity); backbone stand-in
    pooled = jnp.mean(patches, axis=1)                    # (B, Dp)
    feat = pooled @ params['w_pe']                        # (B, F)
    emb = feat @ params['w_head'] + params['b_head']      # (B, 128)
    x = jnp.concatenate([emb, dense], axis=1)             # (B, 128 + num_dense)
    w1 = jnp.concatenate([params['w1_emb'], params['w1_dense']], axis=0)
    h = jnp.maximum(x @ w1 + params['b1'], 0.0)
    return h @ params['w2'] + params['b2']


def init_params(key, *, patch=4, in_ch=3, n_features=64, num_dense=12,
                out_features=1):
    """Deterministic synthetic weights (shapes follow PetNet.__init__)."""
    ks = jax.random.split(key, 8)
    dp = in_ch * patch * patch
    s = lambda k, shp, fan_in: (jax.random.normal(k, shp, jnp.float32)
                                / jnp.sqrt(jnp.float32(fan_in)))
    return {
        'patch': patch,
        'out_features': out_features,
        # backbone stand-in: patch embedding
        'w_pe': s(ks[0], (dp, n_features), dp),
        # self.model.head = Linear(n_features, 128)
        'w_head': s(ks[1], (n_features, 128), n_features),
        'b_head': jax.random.normal(ks[2], (1, 128), jnp.float32) * 0.01,
        # fc[0] = Linear(128 + num_dense, 64)  (split into emb / dense halves)
        'w1_emb': s(ks[3], (128, 64), 128 + num_dense),
        'w1_dense': s(ks[4], (num_dense, 64), 128 + num_dense),
        'b1': jax.random.normal(ks[5], (1, 64), jnp.float32) * 0.01,
        # fc[2] = Linear(64, out_features)
        'w2': s(ks[6], (64, out_features), 64),
        'b2': jax.random.normal(ks[7], (1, out_features), jnp.float32) * 0.01,
    }


if __name__ == "__main__":
    key = jax.random.PRNGKey(0)
    k_img, k_dense, k_w = jax.random.split(key, 3)

    B, C, H, W = 2, 3, 32, 32          # small stand-in for (8, 3, 384, 384)
    NUM_DENSE = 12                      # len(params['dense_features']) == 12

    image = jax.random.normal(k_img, (B, C, H, W), jnp.float32)
    dense = jax.random.normal(k_dense, (B, NUM_DENSE), jnp.float32)
    wparams = init_params(k_w, patch=4, in_ch=C, n_features=64,
                          num_dense=NUM_DENSE, out_features=1)

    out = petnet_forward(image, dense, wparams)
    out = jax.block_until_ready(out)

    ref = petnet_reference(image, dense, wparams)
    assert out.shape == (B, 1), out.shape
    # MXU pass precision on f32 matmuls => modest tolerance
    assert jnp.allclose(out, ref, atol=2e-2, rtol=2e-2), (out, ref)

    print("KERNEL_OK")
</pallas_src>

<mosaic_0001>
module attributes {stable_mosaic.version = 11 : i64} {
  func.func @petnet_kernel(%arg0: i32, %arg1: memref<1x96x32xf32, #tpu.memory_space<vmem>>, %arg2: memref<1x1x128xf32, #tpu.memory_space<vmem>>, %arg3: memref<12x96xf32, #tpu.memory_space<vmem>>, %arg4: memref<12x32x64xf32, #tpu.memory_space<vmem>>, %arg5: memref<64x128xf32, #tpu.memory_space<vmem>>, %arg6: memref<1x128xf32, #tpu.memory_space<vmem>>, %arg7: memref<128x64xf32, #tpu.memory_space<vmem>>, %arg8: memref<128x64xf32, #tpu.memory_space<vmem>>, %arg9: memref<1x64xf32, #tpu.memory_space<vmem>>, %arg10: memref<64x128xf32, #tpu.memory_space<vmem>>, %arg11: memref<1x128xf32, #tpu.memory_space<vmem>>, %arg12: memref<1x1x128xf32, #tpu.memory_space<vmem>>) attributes {dimension_semantics = [#tpu.dimension_semantics<parallel>], iteration_bounds = array<i64: 2>, scalar_prefetch = 0 : i64, scratch_operands = 0 : i64, tpu.core_type = #tpu.core_type<tc>, window_params = [{transform_indices = @transform_0, window_bounds = array<i64: 1, 96, 32>}, {transform_indices = @transform_1, window_bounds = array<i64: 1, 1, 128>}, {pipeline_mode = #tpu.pipeline_mode<synchronous>, transform_indices = @transform_2, window_bounds = array<i64: 12, 96>}, {pipeline_mode = #tpu.pipeline_mode<synchronous>, transform_indices = @transform_3, window_bounds = array<i64: 12, 32, 64>}, {pipeline_mode = #tpu.pipeline_mode<synchronous>, transform_indices = @transform_4, window_bounds = array<i64: 64, 128>}, {pipeline_mode = #tpu.pipeline_mode<synchronous>, transform_indices = @transform_5, window_bounds = array<i64: 1, 128>}, {pipeline_mode = #tpu.pipeline_mode<synchronous>, transform_indices = @transform_6, window_bounds = array<i64: 128, 64>}, {pipeline_mode = #tpu.pipeline_mode<synchronous>, transform_indices = @transform_7, window_bounds = array<i64: 128, 64>}, {pipeline_mode = #tpu.pipeline_mode<synchronous>, transform_indices = @transform_8, window_bounds = array<i64: 1, 64>}, {pipeline_mode = #tpu.pipeline_mode<synchronous>, transform_indices = @transform_9, window_bounds = array<i64: 64, 128>}, {pipeline_mode = #tpu.pipeline_mode<synchronous>, transform_indices = @transform_10, window_bounds = array<i64: 1, 128>}, {transform_indices = @transform_11, window_bounds = array<i64: 1, 1, 128>}]} {
    %c0 = arith.constant 0 : index
    %c0_0 = arith.constant 0 : index
    %c0_1 = arith.constant 0 : index
    %0 = vector.load %arg1[%c0, %c0_0, %c0_1] : memref<1x96x32xf32, #tpu.memory_space<vmem>>, vector<1x96x32xf32>
    %1 = vector.shape_cast %0 : vector<1x96x32xf32> to vector<96x32xf32>
    %c0_2 = arith.constant 0 : index
    %c0_3 = arith.constant 0 : index
    %2 = vector.load %arg3[%c0_2, %c0_3] : memref<12x96xf32, #tpu.memory_space<vmem>>, vector<12x96xf32>
    %cst = arith.constant dense<0.000000e+00> : vector<12x32xf32>
    %3 = tpu.matmul %2, %1, %cst {dimension_numbers = #tpu.dot_dimension_numbers<[1], [0], [0], [1], [0, 0, 1, 1], [], []>} : vector<12x96xf32>, vector<96x32xf32>, vector<12x32xf32> -> vector<12x32xf32>
    %cst_4 = arith.constant 0.000000e+00 : f32
    %4 = vector.broadcast %cst_4 : f32 to vector<1x64xf32>
    %5 = vector.extract_strided_slice %3 {offsets = [0, 0], sizes = [1, 32], strides = [1, 1]} : vector<12x32xf32> to vector<1x32xf32>
    %c0_5 = arith.constant 0 : index
    %c0_6 = arith.constant 0 : index
    %c0_7 = arith.constant 0 : index
    %6 = vector.load %arg4[%c0_5, %c0_6, %c0_7] : memref<12x32x64xf32, #tpu.memory_space<vmem>>, vector<1x32x64xf32>
    %7 = vector.shape_cast %6 : vector<1x32x64xf32> to vector<32x64xf32>
    %cst_8 = arith.constant dense<0.000000e+00> : vector<1x64xf32>
    %8 = tpu.matmul %5, %7, %cst_8 {dimension_numbers = #tpu.dot_dimension_numbers<[1], [0], [0], [1], [0, 0, 1, 1], [], []>} : vector<1x32xf32>, vector<32x64xf32>, vector<1x64xf32> -> vector<1x64xf32>
    %9 = arith.addf %4, %8 : vector<1x64xf32>
    %10 = vector.extract_strided_slice %3 {offsets = [1, 0], sizes = [1, 32], strides = [1, 1]} : vector<12x32xf32> to vector<1x32xf32>
    %c1 = arith.constant 1 : index
    %c0_9 = arith.constant 0 : index
    %c0_10 = arith.constant 0 : index
    %11 = vector.load %arg4[%c1, %c0_9, %c0_10] : memref<12x32x64xf32, #tpu.memory_space<vmem>>, vector<1x32x64xf32>
    %12 = vector.shape_cast %11 : vector<1x32x64xf32> to vector<32x64xf32>
    %cst_11 = arith.constant dense<0.000000e+00> : vector<1x64xf32>
    %13 = tpu.matmul %10, %12, %cst_11 {dimension_numbers = #tpu.dot_dimension_numbers<[1], [0], [0], [1], [0, 0, 1, 1], [], []>} : vector<1x32xf32>, vector<32x64xf32>, vector<1x64xf32> -> vector<1x64xf32>
    %14 = arith.addf %9, %13 : vector<1x64xf32>
    %15 = vector.extract_strided_slice %3 {offsets = [2, 0], sizes = [1, 32], strides = [1, 1]} : vector<12x32xf32> to vector<1x32xf32>
    %c2 = arith.constant 2 : index
    %c0_12 = arith.constant 0 : index
    %c0_13 = arith.constant 0 : index
    %16 = vector.load %arg4[%c2, %c0_12, %c0_13] : memref<12x32x64xf32, #tpu.memory_space<vmem>>, vector<1x32x64xf32>
    %17 = vector.shape_cast %16 : vector<1x32x64xf32> to vector<32x64xf32>
    %cst_14 = arith.constant dense<0.000000e+00> : vector<1x64xf32>
    %18 = tpu.matmul %15, %17, %cst_14 {dimension_numbers = #tpu.dot_dimension_numbers<[1], [0], [0], [1], [0, 0, 1, 1], [], []>} : vector<1x32xf32>, vector<32x64xf32>, vector<1x64xf32> -> vector<1x64xf32>
    %19 = arith.addf %14, %18 : vector<1x64xf32>
    %20 = vector.extract_strided_slice %3 {offsets = [3, 0], sizes = [1, 32], strides = [1, 1]} : vector<12x32xf32> to vector<1x32xf32>
    %c3 = arith.constant 3 : index
    %c0_15 = arith.constant 0 : index
    %c0_16 = arith.constant 0 : index
    %21 = vector.load %arg4[%c3, %c0_15, %c0_16] : memref<12x32x64xf32, #tpu.memory_space<vmem>>, vector<1x32x64xf32>
    %22 = vector.shape_cast %21 : vector<1x32x64xf32> to vector<32x64xf32>
    %cst_17 = arith.constant dense<0.000000e+00> : vector<1x64xf32>
    %23 = tpu.matmul %20, %22, %cst_17 {dimension_numbers = #tpu.dot_dimension_numbers<[1], [0], [0], [1], [0, 0, 1, 1], [], []>} : vector<1x32xf32>, vector<32x64xf32>, vector<1x64xf32> -> vector<1x64xf32>
    %24 = arith.addf %19, %23 : vector<1x64xf32>
    %25 = vector.extract_strided_slice %3 {offsets = [4, 0], sizes = [1, 32], strides = [1, 1]} : vector<12x32xf32> to vector<1x32xf32>
    %c4 = arith.constant 4 : index
    %c0_18 = arith.constant 0 : index
    %c0_19 = arith.constant 0 : index
    %26 = vector.load %arg4[%c4, %c0_18, %c0_19] : memref<12x32x64xf32, #tpu.memory_space<vmem>>, vector<1x32x64xf32>
    %27 = vector.shape_cast %26 : vector<1x32x64xf32> to vector<32x64xf32>
    %cst_20 = arith.constant dense<0.000000e+00> : vector<1x64xf32>
    %28 = tpu.matmul %25, %27, %cst_20 {dimension_numbers = #tpu.dot_dimension_numbers<[1], [0], [0], [1], [0, 0, 1, 1], [], []>} : vector<1x32xf32>, vector<32x64xf32>, vector<1x64xf32> -> vector<1x64xf32>
    %29 = arith.addf %24, %28 : vector<1x64xf32>
    %30 = vector.extract_strided_slice %3 {offsets = [5, 0], sizes = [1, 32], strides = [1, 1]} : vector<12x32xf32> to vector<1x32xf32>
    %c5 = arith.constant 5 : index
    %c0_21 = arith.constant 0 : index
    %c0_22 = arith.constant 0 : index
    %31 = vector.load %arg4[%c5, %c0_21, %c0_22] : memref<12x32x64xf32, #tpu.memory_space<vmem>>, vector<1x32x64xf32>
    %32 = vector.shape_cast %31 : vector<1x32x64xf32> to vector<32x64xf32>
    %cst_23 = arith.constant dense<0.000000e+00> : vector<1x64xf32>
    %33 = tpu.matmul %30, %32, %cst_23 {dimension_numbers = #tpu.dot_dimension_numbers<[1], [0], [0], [1], [0, 0, 1, 1], [], []>} : vector<1x32xf32>, vector<32x64xf32>, vector<1x64xf32> -> vector<1x64xf32>
    %34 = arith.addf %29, %33 : vector<1x64xf32>
    %35 = vector.extract_strided_slice %3 {offsets = [6, 0], sizes = [1, 32], strides = [1, 1]} : vector<12x32xf32> to vector<1x32xf32>
    %c6 = arith.constant 6 : index
    %c0_24 = arith.constant 0 : index
    %c0_25 = arith.constant 0 : index
    %36 = vector.load %arg4[%c6, %c0_24, %c0_25] : memref<12x32x64xf32, #tpu.memory_space<vmem>>, vector<1x32x64xf32>
    %37 = vector.shape_cast %36 : vector<1x32x64xf32> to vector<32x64xf32>
    %cst_26 = arith.constant dense<0.000000e+00> : vector<1x64xf32>
    %38 = tpu.matmul %35, %37, %cst_26 {dimension_numbers = #tpu.dot_dimension_numbers<[1], [0], [0], [1], [0, 0, 1, 1], [], []>} : vector<1x32xf32>, vector<32x64xf32>, vector<1x64xf32> -> vector<1x64xf32>
    %39 = arith.addf %34, %38 : vector<1x64xf32>
    %40 = vector.extract_strided_slice %3 {offsets = [7, 0], sizes = [1, 32], strides = [1, 1]} : vector<12x32xf32> to vector<1x32xf32>
    %c7 = arith.constant 7 : index
    %c0_27 = arith.constant 0 : index
    %c0_28 = arith.constant 0 : index
    %41 = vector.load %arg4[%c7, %c0_27, %c0_28] : memref<12x32x64xf32, #tpu.memory_space<vmem>>, vector<1x32x64xf32>
    %42 = vector.shape_cast %41 : vector<1x32x64xf32> to vector<32x64xf32>
    %cst_29 = arith.constant dense<0.000000e+00> : vector<1x64xf32>
    %43 = tpu.matmul %40, %42, %cst_29 {dimension_numbers = #tpu.dot_dimension_numbers<[1], [0], [0], [1], [0, 0, 1, 1], [], []>} : vector<1x32xf32>, vector<32x64xf32>, vector<1x64xf32> -> vector<1x64xf32>
    %44 = arith.addf %39, %43 : vector<1x64xf32>
    %45 = vector.extract_strided_slice %3 {offsets = [8, 0], sizes = [1, 32], strides = [1, 1]} : vector<12x32xf32> to vector<1x32xf32>
    %c8 = arith.constant 8 : index
    %c0_30 = arith.constant 0 : index
    %c0_31 = arith.constant 0 : index
    %46 = vector.load %arg4[%c8, %c0_30, %c0_31] : memref<12x32x64xf32, #tpu.memory_space<vmem>>, vector<1x32x64xf32>
    %47 = vector.shape_cast %46 : vector<1x32x64xf32> to vector<32x64xf32>
    %cst_32 = arith.constant dense<0.000000e+00> : vector<1x64xf32>
    %48 = tpu.matmul %45, %47, %cst_32 {dimension_numbers = #tpu.dot_dimension_numbers<[1], [0], [0], [1], [0, 0, 1, 1], [], []>} : vector<1x32xf32>, vector<32x64xf32>, vector<1x64xf32> -> vector<1x64xf32>
    %49 = arith.addf %44, %48 : vector<1x64xf32>
    %50 = vector.extract_strided_slice %3 {offsets = [9, 0], sizes = [1, 32], strides = [1, 1]} : vector<12x32xf32> to vector<1x32xf32>
    %c9 = arith.constant 9 : index
    %c0_33 = arith.constant 0 : index
    %c0_34 = arith.constant 0 : index
    %51 = vector.load %arg4[%c9, %c0_33, %c0_34] : memref<12x32x64xf32, #tpu.memory_space<vmem>>, vector<1x32x64xf32>
    %52 = vector.shape_cast %51 : vector<1x32x64xf32> to vector<32x64xf32>
    %cst_35 = arith.constant dense<0.000000e+00> : vector<1x64xf32>
    %53 = tpu.matmul %50, %52, %cst_35 {dimension_numbers = #tpu.dot_dimension_numbers<[1], [0], [0], [1], [0, 0, 1, 1], [], []>} : vector<1x32xf32>, vector<32x64xf32>, vector<1x64xf32> -> vector<1x64xf32>
    %54 = arith.addf %49, %53 : vector<1x64xf32>
    %55 = vector.extract_strided_slice %3 {offsets = [10, 0], sizes = [1, 32], strides = [1, 1]} : vector<12x32xf32> to vector<1x32xf32>
    %c10 = arith.constant 10 : index
    %c0_36 = arith.constant 0 : index
    %c0_37 = arith.constant 0 : index
    %56 = vector.load %arg4[%c10, %c0_36, %c0_37] : memref<12x32x64xf32, #tpu.memory_space<vmem>>, vector<1x32x64xf32>
    %57 = vector.shape_cast %56 : vector<1x32x64xf32> to vector<32x64xf32>
    %cst_38 = arith.constant dense<0.000000e+00> : vector<1x64xf32>
    %58 = tpu.matmul %55, %57, %cst_38 {dimension_numbers = #tpu.dot_dimension_numbers<[1], [0], [0], [1], [0, 0, 1, 1], [], []>} : vector<1x32xf32>, vector<32x64xf32>, vector<1x64xf32> -> vector<1x64xf32>
    %59 = arith.addf %54, %58 : vector<1x64xf32>
    %60 = vector.extract_strided_slice %3 {offsets = [11, 0], sizes = [1, 32], strides = [1, 1]} : vector<12x32xf32> to vector<1x32xf32>
    %c11 = arith.constant 11 : index
    %c0_39 = arith.constant 0 : index
    %c0_40 = arith.constant 0 : index
    %61 = vector.load %arg4[%c11, %c0_39, %c0_40] : memref<12x32x64xf32, #tpu.memory_space<vmem>>, vector<1x32x64xf32>
    %62 = vector.shape_cast %61 : vector<1x32x64xf32> to vector<32x64xf32>
    %cst_41 = arith.constant dense<0.000000e+00> : vector<1x64xf32>
    %63 = tpu.matmul %60, %62, %cst_41 {dimension_numbers = #tpu.dot_dimension_numbers<[1], [0], [0], [1], [0, 0, 1, 1], [], []>} : vector<1x32xf32>, vector<32x64xf32>, vector<1x64xf32> -> vector<1x64xf32>
    %64 = arith.addf %59, %63 : vector<1x64xf32>
    %cst_42 = arith.constant 1.562500e-02 : f32
    %65 = vector.broadcast %cst_42 : f32 to vector<1x64xf32>
    %66 = arith.mulf %64, %65 : vector<1x64xf32>
    %c0_43 = arith.constant 0 : index
    %c0_44 = arith.constant 0 : index
    %67 = vector.load %arg5[%c0_43, %c0_44] : memref<64x128xf32, #tpu.memory_space<vmem>>, vector<64x128xf32>
    %cst_45 = arith.constant dense<0.000000e+00> : vector<1x128xf32>
    %68 = tpu.matmul %66, %67, %cst_45 {dimension_numbers = #tpu.dot_dimension_numbers<[1], [0], [0], [1], [0, 0, 1, 1], [], []>} : vector<1x64xf32>, vector<64x128xf32>, vector<1x128xf32> -> vector<1x128xf32>
    %c0_46 = arith.constant 0 : index
    %c0_47 = arith.constant 0 : index
    %69 = vector.load %arg6[%c0_46, %c0_47] : memref<1x128xf32, #tpu.memory_space<vmem>>, vector<1x128xf32>
    %70 = arith.addf %68, %69 : vector<1x128xf32>
    %c0_48 = arith.constant 0 : index
    %c0_49 = arith.constant 0 : index
    %71 = vector.load %arg7[%c0_48, %c0_49] : memref<128x64xf32, #tpu.memory_space<vmem>>, vector<128x64xf32>
    %cst_50 = arith.constant dense<0.000000e+00> : vector<1x64xf32>
    %72 = tpu.matmul %70, %71, %cst_50 {dimension_numbers = #tpu.dot_dimension_numbers<[1], [0], [0], [1], [0, 0, 1, 1], [], []>} : vector<1x128xf32>, vector<128x64xf32>, vector<1x64xf32> -> vector<1x64xf32>
    %c0_51 = arith.constant 0 : index
    %c0_52 = arith.constant 0 : index
    %c0_53 = arith.constant 0 : index
    %73 = vector.load %arg2[%c0_51, %c0_52, %c0_53] : memref<1x1x128xf32, #tpu.memory_space<vmem>>, vector<1x1x128xf32>
    %74 = vector.shape_cast %73 : vector<1x1x128xf32> to vector<1x128xf32>
    %c0_54 = arith.constant 0 : index
    %c0_55 = arith.constant 0 : index
    %75 = vector.load %arg8[%c0_54, %c0_55] : memref<128x64xf32, #tpu.memory_space<vmem>>, vector<128x64xf32>
    %cst_56 = arith.constant dense<0.000000e+00> : vector<1x64xf32>
    %76 = tpu.matmul %74, %75, %cst_56 {dimension_numbers = #tpu.dot_dimension_numbers<[1], [0], [0], [1], [0, 0, 1, 1], [], []>} : vector<1x128xf32>, vector<128x64xf32>, vector<1x64xf32> -> vector<1x64xf32>
    %77 = arith.addf %72, %76 : vector<1x64xf32>
    %c0_57 = arith.constant 0 : index
    %c0_58 = arith.constant 0 : index
    %78 = vector.load %arg9[%c0_57, %c0_58] : memref<1x64xf32, #tpu.memory_space<vmem>>, vector<1x64xf32>
    %79 = arith.addf %77, %78 : vector<1x64xf32>
    %cst_59 = arith.constant 0.000000e+00 : f32
    %80 = vector.broadcast %cst_59 : f32 to vector<1x64xf32>
    %81 = arith.maximumf %79, %80 : vector<1x64xf32>
    %c0_60 = arith.constant 0 : index
    %c0_61 = arith.constant 0 : index
    %82 = vector.load %arg10[%c0_60, %c0_61] : memref<64x128xf32, #tpu.memory_space<vmem>>, vector<64x128xf32>
    %cst_62 = arith.constant dense<0.000000e+00> : vector<1x128xf32>
    %83 = tpu.matmul %81, %82, %cst_62 {dimension_numbers = #tpu.dot_dimension_numbers<[1], [0], [0], [1], [0, 0, 1, 1], [], []>} : vector<1x64xf32>, vector<64x128xf32>, vector<1x128xf32> -> vector<1x128xf32>
    %c0_63 = arith.constant 0 : index
    %c0_64 = arith.constant 0 : index
    %84 = vector.load %arg11[%c0_63, %c0_64] : memref<1x128xf32, #tpu.memory_space<vmem>>, vector<1x128xf32>
    %85 = arith.addf %83, %84 : vector<1x128xf32>
    %c0_65 = arith.constant 0 : index
    %c0_66 = arith.constant 0 : index
    %c0_67 = arith.constant 0 : index
    %86 = vector.load %arg12[%c0_65, %c0_66, %c0_67] : memref<1x1x128xf32, #tpu.memory_space<vmem>>, vector<1x1x128xf32>
    %87 = vector.shape_cast %86 : vector<1x1x128xf32> to vector<1x128xf32>
    %88 = vector.shape_cast %85 : vector<1x128xf32> to vector<1x1x128xf32>
    tpu.vector_store %arg12[%c0_65, %c0_66, %c0_67], %88 {strides = array<i32>} : memref<1x1x128xf32, #tpu.memory_space<vmem>>, vector<1x1x128xf32>,
    return
  }
  func.func @transform_0(%arg0: i32) -> (i32, i32, i32) {
    %c0_i32 = arith.constant 0 : i32
    %c0_i32_0 = arith.constant 0 : i32
    %c0_i32_1 = arith.constant 0 : i32
    return %arg0, %c0_i32, %c0_i32_0 : i32, i32, i32
  }
  func.func @transform_1(%arg0: i32) -> (i32, i32, i32) {
    %c0_i32 = arith.constant 0 : i32
    %c0_i32_0 = arith.constant 0 : i32
    %c0_i32_1 = arith.constant 0 : i32
    return %arg0, %c0_i32, %c0_i32_0 : i32, i32, i32
  }
  func.func @transform_2(%arg0: i32) -> (i32, i32) {
    %c0_i32 = arith.constant 0 : i32
    %c0_i32_0 = arith.constant 0 : i32
    %c0_i32_1 = arith.constant 0 : i32
    return %c0_i32, %c0_i32_0 : i32, i32
  }
  func.func @transform_3(%arg0: i32) -> (i32, i32, i32) {
    %c0_i32 = arith.constant 0 : i32
    %c0_i32_0 = arith.constant 0 : i32
    %c0_i32_1 = arith.constant 0 : i32
    %c0_i32_2 = arith.constant 0 : i32
    return %c0_i32, %c0_i32_0, %c0_i32_1 : i32, i32, i32
  }
  func.func @transform_4(%arg0: i32) -> (i32, i32) {
    %c0_i32 = arith.constant 0 : i32
    %c0_i32_0 = arith.constant 0 : i32
    %c0_i32_1 = arith.constant 0 : i32
    return %c0_i32, %c0_i32_0 : i32, i32
  }
  func.func @transform_5(%arg0: i32) -> (i32, i32) {
    %c0_i32 = arith.constant 0 : i32
    %c0_i32_0 = arith.constant 0 : i32
    %c0_i32_1 = arith.constant 0 : i32
    return %c0_i32, %c0_i32_0 : i32, i32
  }
  func.func @transform_6(%arg0: i32) -> (i32, i32) {
    %c0_i32 = arith.constant 0 : i32
    %c0_i32_0 = arith.constant 0 : i32
    %c0_i32_1 = arith.constant 0 : i32
    return %c0_i32, %c0_i32_0 : i32, i32
  }
  func.func @transform_7(%arg0: i32) -> (i32, i32) {
    %c0_i32 = arith.constant 0 : i32
    %c0_i32_0 = arith.constant 0 : i32
    %c0_i32_1 = arith.constant 0 : i32
    return %c0_i32, %c0_i32_0 : i32, i32
  }
  func.func @transform_8(%arg0: i32) -> (i32, i32) {
    %c0_i32 = arith.constant 0 : i32
    %c0_i32_0 = arith.constant 0 : i32
    %c0_i32_1 = arith.constant 0 : i32
    return %c0_i32, %c0_i32_0 : i32, i32
  }
  func.func @transform_9(%arg0: i32) -> (i32, i32) {
    %c0_i32 = arith.constant 0 : i32
    %c0_i32_0 = arith.constant 0 : i32
    %c0_i32_1 = arith.constant 0 : i32
    return %c0_i32, %c0_i32_0 : i32, i32
  }
  func.func @transform_10(%arg0: i32) -> (i32, i32) {
    %c0_i32 = arith.constant 0 : i32
    %c0_i32_0 = arith.constant 0 : i32
    %c0_i32_1 = arith.constant 0 : i32
    return %c0_i32, %c0_i32_0 : i32, i32
  }
  func.func @transform_11(%arg0: i32) -> (i32, i32, i32) {
    %c0_i32 = arith.constant 0 : i32
    %c0_i32_0 = arith.constant 0 : i32
    %c0_i32_1 = arith.constant 0 : i32
    return %arg0, %c0_i32, %c0_i32_0 : i32, i32, i32
  }
}

</mosaic_0001>

<llo_original>
// kernel: tpu_custom_call.1
$region0: #{tpu_custom_call.1}
  #allocation0 [shape = 'u32[]', space=smem, size = 0x4, offset = 0x4, fixed_abs, tag = 'smem constant byte address 0x4 - core index']
  #allocation1 [shape = 'u32[144,128]{1,0:T(1,128)}', space=vmem, size = 0x12000, scoped, tag = 'internal scratch']
  %s0 = inlined_call_operand.vmem [shape: f32[2,96,32], index: 0, kind: input, shape index: {}]
  %s1 = inlined_call_operand.vmem [shape: f32[2,1,128], index: 1, kind: input, shape index: {}]
  %s2 = inlined_call_operand.vmem [shape: f32[12,96], index: 2, kind: input, shape index: {}]
  %s3 = inlined_call_operand.vmem [shape: f32[12,32,64], index: 3, kind: input, shape index: {}]
  %s4 = inlined_call_operand.vmem [shape: f32[64,128], index: 4, kind: input, shape index: {}]
  %s5 = inlined_call_operand.vmem [shape: f32[1,128], index: 5, kind: input, shape index: {}]
  %s6 = inlined_call_operand.vmem [shape: f32[128,64], index: 6, kind: input, shape index: {}]
  %s7 = inlined_call_operand.vmem [shape: f32[128,64], index: 7, kind: input, shape index: {}]
  %s8 = inlined_call_operand.vmem [shape: f32[1,64], index: 8, kind: input, shape index: {}]
  %s9 = inlined_call_operand.vmem [shape: f32[64,128], index: 9, kind: input, shape index: {}]
  %s10 = inlined_call_operand.vmem [shape: f32[1,128], index: 10, kind: input, shape index: {}]
  %s11 = inlined_call_operand.hbm [shape: f32[2,1,128], index: 11, kind: output, shape index: {}]
  %s12 = sld [smem:[#allocation0]]
  $region77: #{tpu_custom_call.1} parent=0
    _
  %s14 = ssub.s32 1, %s12
  %s15 = scalar_select 0, %s14, %s12
  $region1: #{tpu_custom_call.1} parent=0
    #allocation2 [shape = 'u8[1024]{0}', space=vmem, size = 0x400, scoped, tag = 'output window, operand 0']
    #allocation3 [shape = 's32[2]{0}', space=sflag, size = 0x8, scoped, tag = 'scoped memory for tpu_custom_call.1']
    %16 = vsyncpa [#allocation3], 0
    %s17 = scalar_lea.sflag [#allocation3], 1
    %18 = vsyncpa %s17, 0
    loop: start=0, step=1, limit=4
    $region2: #{tpu_custom_call.1} parent=1 // loop_pre_header
      _
    $region3: #{tpu_custom_call.1} parent=1 // loop_header
      %s20 = sphi 0, %s24
      %p21 = scmp.ge.s32.totalorder %s20, 4
      %s30 = sphi 0, %s32
      %s33 = sphi 0, %s30
      %s34 = sphi 0, %s33
      %s50 = sphi 0, %s34
      %s56 = sphi 0, %s58
      %s59 = sphi 0, %s56
      %s60 = sphi 0, %s59
      %s76 = sphi 0, %s60
      %s80 = sphi 0, %s80
      %s82 = sphi 0, %s80
      %s83 = sphi 0, %s82
      %s97 = sphi 0, %s83
      %s101 = sphi 0, %s101
      %s103 = sphi 0, %s101
      %s104 = sphi 0, %s103
      %s118 = sphi 0, %s104
      %s122 = sphi 0, %s122
      %s124 = sphi 0, %s122
      %s125 = sphi 0, %s124
      %s139 = sphi 0, %s125
      %s143 = sphi 0, %s143
      %s145 = sphi 0, %s143
      %s146 = sphi 0, %s145
      %s160 = sphi 0, %s146
      %s164 = sphi 0, %s164
      %s166 = sphi 0, %s164
      %s167 = sphi 0, %s166
      %s181 = sphi 0, %s167
      %s185 = sphi 0, %s185
      %s187 = sphi 0, %s185
      %s188 = sphi 0, %s187
      %s202 = sphi 0, %s188
      %s206 = sphi 0, %s206
      %s208 = sphi 0, %s206
      %s209 = sphi 0, %s208
      %s223 = sphi 0, %s209
      %s227 = sphi 0, %s227
      %s229 = sphi 0, %s227
      %s230 = sphi 0, %s229
      %s244 = sphi 0, %s230
      %s248 = sphi 0, %s248
      %s250 = sphi 0, %s248
      %s251 = sphi 0, %s250
      %s265 = sphi 0, %s251
      %s271 = sphi 0, %s273
      %s274 = sphi 0, %s271
      %s275 = sphi 0, %s274
      %s291 = sphi 0, %s275
    $region4: #{tpu_custom_call.1} parent=1 // loop_header_branch
      %23 = sbr.rel (%p21) target = $region8
    $region5: #{tpu_custom_call.1} parent=1 // loop_body
      %s25 = ssub.s32 %s20, 1
      %s26 = ssub.s32 %s20, 2
      %s27 = sadd.s32 %s20, 1
      %s28 = ssub.s32 %s20, %s27
      %p29 = scmp.eq.s32.totalorder %s28, 0
      %s31 = sadd.s32 %s30, 1
      %s32 = scalar_select %p29, %s30, %s31
      %p35 = pneg %p29
      %p36 = scmp.eq.s32.totalorder %s20, 1
      %p37 = por %p35, %p36
      %p38 = scmp.ne.s32.totalorder %s30, %s33
      %p39 = scmp.eq.s32.totalorder %s20, 0
      %p40 = por %p38, %p39
      %p41 = scmp.ne.s32.totalorder %s30, %s33
      %p42 = scmp.eq.s32.totalorder %s25, 1
      %p43 = por %p41, %p42
      %p44 = scmp.ne.s32.totalorder %s33, %s34
      %p45 = scmp.eq.s32.totalorder %s25, 0
      %p46 = por %p44, %p45
      %p47 = scmp.ne.s32.totalorder %s33, %s34
      %p48 = scmp.eq.s32.totalorder %s26, 1
      %p49 = por %p47, %p48
      %p51 = scmp.ne.s32.totalorder %s34, %s50
      %p52 = scmp.eq.s32.totalorder %s26, 0
      %p53 = por %p51, %p52
      %s54 = ssub.s32 %s20, %s27
      %p55 = scmp.eq.s32.totalorder %s54, 0
      %s57 = sadd.s32 %s56, 1
      %s58 = scalar_select %p55, %s56, %s57
      %p61 = pneg %p55
      %p62 = scmp.eq.s32.totalorder %s20, 1
      %p63 = por %p61, %p62
      %p64 = scmp.ne.s32.totalorder %s56, %s59
      %p65 = scmp.eq.s32.totalorder %s20, 0
      %p66 = por %p64, %p65
      %p67 = scmp.ne.s32.totalorder %s56, %s59
      %p68 = scmp.eq.s32.totalorder %s25, 1
      %p69 = por %p67, %p68
      %p70 = scmp.ne.s32.totalorder %s59, %s60
      %p71 = scmp.eq.s32.totalorder %s25, 0
      %p72 = por %p70, %p71
      %p73 = scmp.ne.s32.totalorder %s59, %s60
      %p74 = scmp.eq.s32.totalorder %s26, 1
      %p75 = por %p73, %p74
      %p77 = scmp.ne.s32.totalorder %s60, %s76
      %p78 = scmp.eq.s32.totalorder %s26, 0
      %p79 = por %p77, %p78
      %s81 = sadd.s32 %s80, 1
      %p84 = scmp.eq.s32.totalorder %s20, 1
      %p85 = scmp.ne.s32.totalorder %s80, %s82
      %p86 = scmp.eq.s32.totalorder %s20, 0
      %p87 = por %p85, %p86
      %p88 = scmp.ne.s32.totalorder %s80, %s82
      %p89 = scmp.eq.s32.totalorder %s25, 1
      %p90 = por %p88, %p89
      %p91 = scmp.ne.s32.totalorder %s82, %s83
      %p92 = scmp.eq.s32.totalorder %s25, 0
      %p93 = por %p91, %p92
      %p94 = scmp.ne.s32.totalorder %s82, %s83
      %p95 = scmp.eq.s32.totalorder %s26, 1
      %p96 = por %p94, %p95
      %p98 = scmp.ne.s32.totalorder %s83, %s97
      %p99 = scmp.eq.s32.totalorder %s26, 0
      %p100 = por %p98, %p99
      %s102 = sadd.s32 %s101, 1
      %p105 = scmp.eq.s32.totalorder %s20, 1
      %p106 = scmp.ne.s32.totalorder %s101, %s103
      %p107 = scmp.eq.s32.totalorder %s20, 0
      %p108 = por %p106, %p107
      %p109 = scmp.ne.s32.totalorder %s101, %s103
      %p110 = scmp.eq.s32.totalorder %s25, 1
      %p111 = por %p109, %p110
      %p112 = scmp.ne.s32.totalorder %s103, %s104
      %p113 = scmp.eq.s32.totalorder %s25, 0
      %p114 = por %p112, %p113
      %p115 = scmp.ne.s32.totalorder %s103, %s104
      %p116 = scmp.eq.s32.totalorder %s26, 1
      %p117 = por %p115, %p116
      %p119 = scmp.ne.s32.totalorder %s104, %s118
      %p120 = scmp.eq.s32.totalorder %s26, 0
      %p121 = por %p119, %p120
      %s123 = sadd.s32 %s122, 1
      %p126 = scmp.eq.s32.totalorder %s20, 1
      %p127 = scmp.ne.s32.totalorder %s122, %s124
      %p128 = scmp.eq.s32.totalorder %s20, 0
      %p129 = por %p127, %p128
      %p130 = scmp.ne.s32.totalorder %s122, %s124
      %p131 = scmp.eq.s32.totalorder %s25, 1
      %p132 = por %p130, %p131
      %p133 = scmp.ne.s32.totalorder %s124, %s125
      %p134 = scmp.eq.s32.totalorder %s25, 0
      %p135 = por %p133, %p134
      %p136 = scmp.ne.s32.totalorder %s124, %s125
      %p137 = scmp.eq.s32.totalorder %s26, 1
      %p138 = por %p136, %p137
      %p140 = scmp.ne.s32.totalorder %s125, %s139
      %p141 = scmp.eq.s32.totalorder %s26, 0
      %p142 = por %p140, %p141
      %s144 = sadd.s32 %s143, 1
      %p147 = scmp.eq.s32.totalorder %s20, 1
      %p148 = scmp.ne.s32.totalorder %s143, %s145
      %p149 = scmp.eq.s32.totalorder %s20, 0
      %p150 = por %p148, %p149
      %p151 = scmp.ne.s32.totalorder %s143, %s145
      %p152 = scmp.eq.s32.totalorder %s25, 1
      %p153 = por %p151, %p152
      %p154 = scmp.ne.s32.totalorder %s145, %s146
      %p155 = scmp.eq.s32.totalorder %s25, 0
      %p156 = por %p154, %p155
      %p157 = scmp.ne.s32.totalorder %s145, %s146
      %p158 = scmp.eq.s32.totalorder %s26, 1
      %p159 = por %p157, %p158
      %p161 = scmp.ne.s32.totalorder %s146, %s160
      %p162 = scmp.eq.s32.totalorder %s26, 0
      %p163 = por %p161, %p162
      %s165 = sadd.s32 %s164, 1
      %p168 = scmp.eq.s32.totalorder %s20, 1
      %p169 = scmp.ne.s32.totalorder %s164, %s166
      %p170 = scmp.eq.s32.totalorder %s20, 0
      %p171 = por %p169, %p170
      %p172 = scmp.ne.s32.totalorder %s164, %s166
      %p173 = scmp.eq.s32.totalorder %s25, 1
      %p174 = por %p172, %p173
      %p175 = scmp.ne.s32.totalorder %s166, %s167
      %p176 = scmp.eq.s32.totalorder %s25, 0
      %p177 = por %p175, %p176
      %p178 = scmp.ne.s32.totalorder %s166, %s167
      %p179 = scmp.eq.s32.totalorder %s26, 1
      %p180 = por %p178, %p179
      %p182 = scmp.ne.s32.totalorder %s167, %s181
      %p183 = scmp.eq.s32.totalorder %s26, 0
      %p184 = por %p182, %p183
      %s186 = sadd.s32 %s185, 1
      %p189 = scmp.eq.s32.totalorder %s20, 1
      %p190 = scmp.ne.s32.totalorder %s185, %s187
      %p191 = scmp.eq.s32.totalorder %s20, 0
      %p192 = por %p190, %p191
      %p193 = scmp.ne.s32.totalorder %s185, %s187
      %p194 = scmp.eq.s32.totalorder %s25, 1
      %p195 = por %p193, %p194
      %p196 = scmp.ne.s32.totalorder %s187, %s188
      %p197 = scmp.eq.s32.totalorder %s25, 0
      %p198 = por %p196, %p197
      %p199 = scmp.ne.s32.totalorder %s187, %s188
      %p200 = scmp.eq.s32.totalorder %s26, 1
      %p201 = por %p199, %p200
      %p203 = scmp.ne.s32.totalorder %s188, %s202
      %p204 = scmp.eq.s32.totalorder %s26, 0
      %p205 = por %p203, %p204
      %s207 = sadd.s32 %s206, 1
      %p210 = scmp.eq.s32.totalorder %s20, 1
      %p211 = scmp.ne.s32.totalorder %s206, %s208
      %p212 = scmp.eq.s32.totalorder %s20, 0
      %p213 = por %p211, %p212
      %p214 = scmp.ne.s32.totalorder %s206, %s208
      %p215 = scmp.eq.s32.totalorder %s25, 1
      %p216 = por %p214, %p215
      %p217 = scmp.ne.s32.totalorder %s208, %s209
      %p218 = scmp.eq.s32.totalorder %s25, 0
      %p219 = por %p217, %p218
      %p220 = scmp.ne.s32.totalorder %s208, %s209
      %p221 = scmp.eq.s32.totalorder %s26, 1
      %p222 = por %p220, %p221
      %p224 = scmp.ne.s32.totalorder %s209, %s223
      %p225 = scmp.eq.s32.totalorder %s26, 0
      %p226 = por %p224, %p225
      %s228 = sadd.s32 %s227, 1
      %p231 = scmp.eq.s32.totalorder %s20, 1
      %p232 = scmp.ne.s32.totalorder %s227, %s229
      %p233 = scmp.eq.s32.totalorder %s20, 0
      %p234 = por %p232, %p233
      %p235 = scmp.ne.s32.totalorder %s227, %s229
      %p236 = scmp.eq.s32.totalorder %s25, 1
      %p237 = por %p235, %p236
      %p238 = scmp.ne.s32.totalorder %s229, %s230
      %p239 = scmp.eq.s32.totalorder %s25, 0
      %p240 = por %p238, %p239
      %p241 = scmp.ne.s32.totalorder %s229, %s230
      %p242 = scmp.eq.s32.totalorder %s26, 1
      %p243 = por %p241, %p242
      %p245 = scmp.ne.s32.totalorder %s230, %s244
      %p246 = scmp.eq.s32.totalorder %s26, 0
      %p247 = por %p245, %p246
      %s249 = sadd.s32 %s248, 1
      %p252 = scmp.eq.s32.totalorder %s20, 1
      %p253 = scmp.ne.s32.totalorder %s248, %s250
      %p254 = scmp.eq.s32.totalorder %s20, 0
      %p255 = por %p253, %p254
      %p256 = scmp.ne.s32.totalorder %s248, %s250
      %p257 = scmp.eq.s32.totalorder %s25, 1
      %p258 = por %p256, %p257
      %p259 = scmp.ne.s32.totalorder %s250, %s251
      %p260 = scmp.eq.s32.totalorder %s25, 0
      %p261 = por %p259, %p260
      %p262 = scmp.ne.s32.totalorder %s250, %s251
      %p263 = scmp.eq.s32.totalorder %s26, 1
      %p264 = por %p262, %p263
      %p266 = scmp.ne.s32.totalorder %s251, %s265
      %p267 = scmp.eq.s32.totalorder %s26, 0
      %p268 = por %p266, %p267
      %s269 = ssub.s32 %s20, %s27
      %p270 = scmp.eq.s32.totalorder %s269, 0
      %s272 = sadd.s32 %s271, 1
      %s273 = scalar_select %p270, %s271, %s272
      %p276 = pneg %p270
      %p277 = scmp.eq.s32.totalorder %s20, 1
      %p278 = por %p276, %p277
      %p279 = scmp.ne.s32.totalorder %s271, %s274
      %p280 = scmp.eq.s32.totalorder %s20, 0
      %p281 = por %p279, %p280
      %p282 = scmp.ne.s32.totalorder %s271, %s274
      %p283 = scmp.eq.s32.totalorder %s25, 1
      %p284 = por %p282, %p283
      %p285 = scmp.ne.s32.totalorder %s274, %s275
      %p286 = scmp.eq.s32.totalorder %s25, 0
      %p287 = por %p285, %p286
      %p288 = scmp.ne.s32.totalorder %s274, %s275
      %p289 = scmp.eq.s32.totalorder %s26, 1
      %p290 = por %p288, %p289
      %p292 = scmp.ne.s32.totalorder %s275, %s291
      %p293 = scmp.eq.s32.totalorder %s26, 0
      %p294 = por %p292, %p293
      %p295 = scmp.le.s32.totalorder 1, %s20
      %p296 = scmp.lt.s32.totalorder %s20, 3
      %p297 = pnand %p295, %p296
      %p298 = pneg %p297
      // Predicated region
      $region9: #{tpu_custom_call.1} parent=5 // pred_check
        _
      $region10: #{tpu_custom_call.1} parent=5 // pred_check_branch
        %300 = sbr.rel (%p297) target = $region12
      $region11: #{tpu_custom_call.1} parent=5 // pred_region
        %s301 = ssub.s32 %s20, 1
        // Predicated region
        $region13: #{tpu_custom_call.1} parent=11 // pred_check
          %p302 = pneg %p93
        $region14: #{tpu_custom_call.1} parent=11 // pred_check_branch
          %304 = sbr.rel (%p302) target = $region16
        $region15: #{tpu_custom_call.1} parent=11 // pred_region
          _
        $region16: #{tpu_custom_call.1} parent=11 // pred_fallthru
          _
        // Predicated region
        $region17: #{tpu_custom_call.1} parent=11 // pred_check
          %p305 = pneg %p114
        $region18: #{tpu_custom_call.1} parent=11 // pred_check_branch
          %307 = sbr.rel (%p305) target = $region20
        $region19: #{tpu_custom_call.1} parent=11 // pred_region
          _
        $region20: #{tpu_custom_call.1} parent=11 // pred_fallthru
          _
        // Predicated region
        $region21: #{tpu_custom_call.1} parent=11 // pred_check
          %p308 = pneg %p135
        $region22: #{tpu_custom_call.1} parent=11 // pred_check_branch
          %310 = sbr.rel (%p308) target = $region24
        $region23: #{tpu_custom_call.1} parent=11 // pred_region
          _
        $region24: #{tpu_custom_call.1} parent=11 // pred_fallthru
          _
        // Predicated region
        $region25: #{tpu_custom_call.1} parent=11 // pred_check
          %p311 = pneg %p156
        $region26: #{tpu_custom_call.1} parent=11 // pred_check_branch
          %313 = sbr.rel (%p311) target = $region28
        $region27: #{tpu_custom_call.1} parent=11 // pred_region
          _
        $region28: #{tpu_custom_call.1} parent=11 // pred_fallthru
          _
        // Predicated region
        $region29: #{tpu_custom_call.1} parent=11 // pred_check
          %p314 = pneg %p177
        $region30: #{tpu_custom_call.1} parent=11 // pred_check_branch
          %316 = sbr.rel (%p314) target = $region32
        $region31: #{tpu_custom_call.1} parent=11 // pred_region
          _
        $region32: #{tpu_custom_call.1} parent=11 // pred_fallthru
          _
        // Predicated region
        $region33: #{tpu_custom_call.1} parent=11 // pred_check
          %p317 = pneg %p198
        $region34: #{tpu_custom_call.1} parent=11 // pred_check_branch
          %319 = sbr.rel (%p317) target = $region36
        $region35: #{tpu_custom_call.1} parent=11 // pred_region
          _
        $region36: #{tpu_custom_call.1} parent=11 // pred_fallthru
          _
        // Predicated region
        $region37: #{tpu_custom_call.1} parent=11 // pred_check
          %p320 = pneg %p219
        $region38: #{tpu_custom_call.1} parent=11 // pred_check_branch
          %322 = sbr.rel (%p320) target = $region40
        $region39: #{tpu_custom_call.1} parent=11 // pred_region
          _
        $region40: #{tpu_custom_call.1} parent=11 // pred_fallthru
          _
        // Predicated region
        $region41: #{tpu_custom_call.1} parent=11 // pred_check
          %p323 = pneg %p240
        $region42: #{tpu_custom_call.1} parent=11 // pred_check_branch
          %325 = sbr.rel (%p323) target = $region44
        $region43: #{tpu_custom_call.1} parent=11 // pred_region
          _
        $region44: #{tpu_custom_call.1} parent=11 // pred_fallthru
          _
        // Predicated region
        $region45: #{tpu_custom_call.1} parent=11 // pred_check
          %p326 = pneg %p261
        $region46: #{tpu_custom_call.1} parent=11 // pred_check_branch
          %328 = sbr.rel (%p326) target = $region48
        $region47: #{tpu_custom_call.1} parent=11 // pred_region
          _
        $region48: #{tpu_custom_call.1} parent=11 // pred_fallthru
          _
      $region12: #{tpu_custom_call.1} parent=5 // pred_fallthru
        _
      %p329 = scmp.lt.s32.totalorder %s20, 2
      // Predicated region
      $region49: #{tpu_custom_call.1} parent=5 // pred_check
        %p330 = pneg %p329
      $region50: #{tpu_custom_call.1} parent=5 // pred_check_branch
        %332 = sbr.rel (%p330) target = $region52
      $region51: #{tpu_custom_call.1} parent=5 // pred_region
        // Predicated region
        $region53: #{tpu_custom_call.1} parent=51 // pred_check
          %p333 = pneg %p40
        $region54: #{tpu_custom_call.1} parent=51 // pred_check_branch
          %335 = sbr.rel (%p333) target = $region56
        $region55: #{tpu_custom_call.1} parent=51 // pred_region
          %p336 = scmp.lt.s32.totalorder %s20, 1
          %s337 = scalar_select %p336, %s20, 1
          %s338 = smul.addr %s337, 12
          %s339 = smul.addr %s338, 8
          %s340 = scalar_lea.vmem %s0, %s339
        $region56: #{tpu_custom_call.1} parent=51 // pred_fallthru
          _
        // Predicated region
        $region57: #{tpu_custom_call.1} parent=51 // pred_check
          %p341 = pneg %p66
        $region58: #{tpu_custom_call.1} parent=51 // pred_check_branch
          %343 = sbr.rel (%p341) target = $region60
        $region59: #{tpu_custom_call.1} parent=51 // pred_region
          %p344 = scmp.lt.s32.totalorder %s20, 1
          %s345 = scalar_select %p344, %s20, 1
          %s346 = scalar_lea.vmem %s1, %s345
        $region60: #{tpu_custom_call.1} parent=51 // pred_fallthru
          _
      $region52: #{tpu_custom_call.1} parent=5 // pred_fallthru
        _
      %p347 = scmp.le.s32.totalorder 1, %s20
      %p348 = scmp.lt.s32.totalorder %s20, 3
      %p349 = pnand %p347, %p348
      %p350 = pneg %p349
      // Predicated region
      $region61: #{tpu_custom_call.1} parent=5 // pred_check
        _
      $region62: #{tpu_custom_call.1} parent=5 // pred_check_branch
        %352 = sbr.rel (%p349) target = $region64
      $region63: #{tpu_custom_call.1} parent=5 // pred_region
        %s353 = ssub.s32 %s20, 1
        %p354 = scmp.lt.s32.totalorder %s25, 1
        %s355 = scalar_select %p354, %s25, 1
        %s356 = smul.addr %s355, 12
        %s357 = smul.addr %s356, 8
        %s358 = scalar_lea.vmem %s0, %s357
        %p359 = pneg %p46
        %p360 = pneg %p43
        %p361 = scmp.lt.s32.totalorder %s25, 1
        %s362 = scalar_select %p361, %s25, 1
        %s363 = scalar_lea.vmem %s1, %s362
        %p364 = pneg %p72
        %p365 = pneg %p69
        %p366 = pneg %p93
        %p367 = pneg %p90
        %p368 = pneg %p114
        %p369 = pneg %p111
        %p370 = pneg %p135
        %p371 = pneg %p132
        %p372 = pneg %p156
        %p373 = pneg %p153
        %p374 = pneg %p177
        %p375 = pneg %p174
        %p376 = pneg %p198
        %p377 = pneg %p195
        %p378 = pneg %p219
        %p379 = pneg %p216
        %p380 = pneg %p240
        %p381 = pneg %p237
        %p382 = pneg %p261
        %p383 = pneg %p258
        %p384 = pneg %p287
        %p385 = pneg %p284
        %s386 = sand.u32 %s274, 1
        %s387 = scalar_lea.sflag [#allocation3], %s386
        %s388 = sand.u32 %s274, 1
        %s389 = scalar_lea.vmem [#allocation2], %s388
        %p390 = scmp.lt.s32.totalorder %s25, 1
        %s391 = scalar_select %p390, %s25, 1
        %s392 = smul.addr %s391, 12
        %s393 = smul.addr %s392, 8
        %s394 = scalar_lea.vmem %s0, %s393
        %p395 = scmp.lt.s32.totalorder %s25, 1
        %s396 = scalar_select %p395, %s25, 1
        %s397 = scalar_lea.vmem %s1, %s396
        %v398 = vld [vmem:[%s394] sm:$0xff]
        %v399 = vld [vmem:[%s394 + $0x8] sm:$0xff]
        %v400 = vld [vmem:[%s394 + $0x10] sm:$0xff]
        %v401 = vld [vmem:[%s394 + $0x18] sm:$0xff]
        %v402 = vld [vmem:[%s394 + $0x20] sm:$0xff]
        %v403 = vld [vmem:[%s394 + $0x28] sm:$0xff]
        %v404 = vld [vmem:[%s394 + $0x30] sm:$0xff]
        %v405 = vld [vmem:[%s394 + $0x38] sm:$0xff]
        %v406 = vld [vmem:[%s394 + $0x40] sm:$0xff]
        %v407 = vld [vmem:[%s394 + $0x48] sm:$0xff]
        %v408 = vld [vmem:[%s394 + $0x50] sm:$0xff]
        %v409 = vld [vmem:[%s394 + $0x58] sm:$0xff]
        %v410 = vld [vmem:[%s2] sm:$0xff]
        %v411 = vld [vmem:[%s2 + $0x8] sm:$0xf]
        %vm412 = vcmask 785408
        %v414 = vsel %vm412, %v410, 0
        %v417 = vsel %vm412, %v411, 0
        %419 = vmatprep.subr.mxu0 0.0
        %420 = vmatpush1.msra.mxu0 0.0
        %421 = vmatprep.subr.mxu0 0.0
        %422 = vmatpush1.msra.mxu0 0.0
        %423 = vmatprep.subr.mxu0 0.0
        %424 = vmatpush1.msra.mxu0 0.0
        %425 = vmatprep.subr.mxu0 0.0
        %426 = vmatpush1.msra.mxu0 0.0
        %427 = vmatprep.subr.mxu0 0.0
        %428 = vmatpush1.msra.mxu0 %v409
        %429 = vmatprep.subr.mxu0 0.0
        %430 = vmatpush1.msra.mxu0 %v408
        %431 = vmatprep.subr.mxu0 0.0
        %432 = vmatpush1.msra.mxu0 %v407
        %433 = vmatprep.subr.mxu0 0.0
        %434 = vmatpush1.msra.mxu0 %v406
        %435 = vmatprep.subr.mxu0 0.0
        %436 = vmatpush1.msra.mxu0 %v405
        %437 = vmatprep.subr.mxu0 0.0
        %438 = vmatpush1.msra.mxu0 %v404
        %439 = vmatprep.subr.mxu0 0.0
        %440 = vmatpush1.msra.mxu0 %v403
        %441 = vmatprep.subr.mxu0 0.0
        %442 = vmatpush1.msra.mxu0 %v402
        %443 = vmatprep.subr.mxu0 0.0
        %444 = vmatpush1.msra.mxu0 %v401
        %445 = vmatprep.subr.mxu0 0.0
        %446 = vmatpush1.msra.mxu0 %v400
        %447 = vmatprep.subr.mxu0 0.0
        %448 = vmatpush1.msra.mxu0 %v399
        %449 = vmatprep.subr.mxu0 0.0
        %450 = vmatpush1.msra.mxu0 %v398
        %451 = vmatprep.subr.mxu0 0.0
        %452 = vmatpush2.msra.mxu0 0.0
        %453 = vmatprep.subr.mxu0 0.0
        %454 = vmatpush2.msra.mxu0 0.0
        %455 = vmatprep.subr.mxu0 0.0
        %456 = vmatpush2.msra.mxu0 0.0
        %457 = vmatprep.subr.mxu0 0.0
        %458 = vmatpush2.msra.mxu0 0.0
        %459 = vmatprep.subr.mxu0 0.0
        %460 = vmatpush2.msra.mxu0 0.0
        %461 = vmatprep.subr.mxu0 0.0
        %462 = vmatpush2.msra.mxu0 0.0
        %463 = vmatprep.subr.mxu0 0.0
        %464 = vmatpush2.msra.mxu0 0.0
        %465 = vmatprep.subr.mxu0 0.0
        %466 = vmatpush2.msra.mxu0 0.0
        %467 = vmatprep.subr.mxu0 0.0
        %468 = vmatpush2.msra.mxu0 0.0
        %469 = vmatprep.subr.mxu0 0.0
        %470 = vmatpush2.msra.mxu0 0.0
        %471 = vmatprep.subr.mxu0 0.0
        %472 = vmatpush2.msra.mxu0 0.0
        %473 = vmatprep.subr.mxu0 0.0
        %474 = vmatpush2.msra.mxu0 0.0
        %475 = vmatprep.subr.mxu0 0.0
        %476 = vmatpush2.msra.mxu0 0.0
        %477 = vmatprep.subr.mxu0 0.0
        %478 = vmatpush2.msra.mxu0 0.0
        %479 = vmatprep.subr.mxu0 0.0
        %480 = vmatpush2.msra.mxu0 0.0
        %481 = vmatprep.subr.mxu0 0.0
        %482 = vmatpush2.msra.mxu0 0.0
        %483 = vmatprep.mubr.f32.mxu0 0.0
        %484 = vmatmul.mubr.f32.gmra.mxu0 %v414
        %v485 = vpop.f32.mrf.mxu0
        %v486 = vadd.f32 0.0, %v485
        %v487 = vpop.f32.mrf.mxu0
        %488 = vmatprep.mubr.f32.mxu0 0.0
        %489 = vmatmul.mubr.f32.gmra.mxu0 %v417
        %v490 = vpop.f32.mrf.mxu0
        %v491 = vadd.f32 0.0, %v490
        %v492 = vpop.f32.mrf.mxu0
        %493 = vdwg.mxu0
        %v494 = vld [vmem:[%s3] sm:$0xff]
        %v495 = vld [vmem:[%s3 + $0x8] sm:$0xff]
        %v496 = vld [vmem:[%s3 + $0x10] sm:$0xff]
        %v497 = vld [vmem:[%s3 + $0x18] sm:$0xff]
        %s498 = scalar_lea.vmem %s3, 32
        %v499 = vld [vmem:[%s498] sm:$0xff]
        %v500 = vld [vmem:[%s498 + $0x8] sm:$0xff]
        %v501 = vld [vmem:[%s498 + $0x10] sm:$0xff]
        %v502 = vld [vmem:[%s498 + $0x18] sm:$0xff]
        %v504 = vrot.slane %v486, 1
        %vm505 = vcmask 261120
        %v506 = vsel %vm505, %v504, 0
        %508 = vmatprep.subr.mxu0 0.0
        %509 = vmatpush1.msra.mxu0 0.0
        %510 = vmatprep.subr.mxu0 0.0
        %511 = vmatpush1.msra.mxu0 0.0
        %512 = vmatprep.subr.mxu0 0.0
        %513 = vmatpush1.msra.mxu0 0.0
        %514 = vmatprep.subr.mxu0 0.0
        %515 = vmatpush1.msra.mxu0 0.0
        %516 = vmatprep.subr.mxu0 0.0
        %517 = vmatpush1.msra.mxu0 0.0
        %518 = vmatprep.subr.mxu0 0.0
        %519 = vmatpush1.msra.mxu0 0.0
        %520 = vmatprep.subr.mxu0 0.0
        %521 = vmatpush1.msra.mxu0 0.0
        %522 = vmatprep.subr.mxu0 0.0
        %523 = vmatpush1.msra.mxu0 0.0
        %524 = vmatprep.subr.mxu0 0.0
        %525 = vmatpush1.msra.mxu0 0.0
        %526 = vmatprep.subr.mxu0 0.0
        %527 = vmatpush1.msra.mxu0 0.0
        %528 = vmatprep.subr.mxu0 0.0
        %529 = vmatpush1.msra.mxu0 0.0
        %530 = vmatprep.subr.mxu0 0.0
        %531 = vmatpush1.msra.mxu0 0.0
        %532 = vmatprep.subr.mxu0 0.0
        %533 = vmatpush1.msra.mxu0 %v502
        %534 = vmatprep.subr.mxu0 0.0
        %535 = vmatpush1.msra.mxu0 %v501
        %536 = vmatprep.subr.mxu0 0.0
        %537 = vmatpush1.msra.mxu0 %v500
        %538 = vmatprep.subr.mxu0 0.0
        %539 = vmatpush1.msra.mxu0 %v499
        %540 = vmatprep.subr.mxu0 0.0
        %541 = vmatpush2.msra.mxu0 0.0
        %542 = vmatprep.subr.mxu0 0.0
        %543 = vmatpush2.msra.mxu0 0.0
        %544 = vmatprep.subr.mxu0 0.0
        %545 = vmatpush2.msra.mxu0 0.0
        %546 = vmatprep.subr.mxu0 0.0
        %547 = vmatpush2.msra.mxu0 0.0
        %548 = vmatprep.subr.mxu0 0.0
        %549 = vmatpush2.msra.mxu0 0.0
        %550 = vmatprep.subr.mxu0 0.0
        %551 = vmatpush2.msra.mxu0 0.0
        %552 = vmatprep.subr.mxu0 0.0
        %553 = vmatpush2.msra.mxu0 0.0
        %554 = vmatprep.subr.mxu0 0.0
        %555 = vmatpush2.msra.mxu0 0.0
        %556 = vmatprep.subr.mxu0 0.0
        %557 = vmatpush2.msra.mxu0 0.0
        %558 = vmatprep.subr.mxu0 0.0
        %559 = vmatpush2.msra.mxu0 0.0
        %560 = vmatprep.subr.mxu0 0.0
        %561 = vmatpush2.msra.mxu0 0.0
        %562 = vmatprep.subr.mxu0 0.0
        %563 = vmatpush2.msra.mxu0 0.0
        %564 = vmatprep.subr.mxu0 0.0
        %565 = vmatpush2.msra.mxu0 0.0
        %566 = vmatprep.subr.mxu0 0.0
        %567 = vmatpush2.msra.mxu0 0.0
        %568 = vmatprep.subr.mxu0 0.0
        %569 = vmatpush2.msra.mxu0 0.0
        %570 = vmatprep.subr.mxu0 0.0
        %571 = vmatpush2.msra.mxu0 0.0
        %572 = vmatprep.mubr.f32.mxu0 0.0
        %573 = vmatmul.mubr.f32.gmra.mxu0 %v506
        %v574 = vpop.f32.mrf.mxu0
        %v575 = vadd.f32 0.0, %v574
        %v576 = vpop.f32.mrf.mxu0
        %577 = vdwg.mxu0
        %v578 = vsel %vm505, %v486, 0
        %580 = vmatprep.subr.mxu0 0.0
        %581 = vmatpush1.msra.mxu0 0.0
        %582 = vmatprep.subr.mxu0 0.0
        %583 = vmatpush1.msra.mxu0 0.0
        %584 = vmatprep.subr.mxu0 0.0
        %585 = vmatpush1.msra.mxu0 0.0
        %586 = vmatprep.subr.mxu0 0.0
        %587 = vmatpush1.msra.mxu0 0.0
        %588 = vmatprep.subr.mxu0 0.0
        %589 = vmatpush1.msra.mxu0 0.0
        %590 = vmatprep.subr.mxu0 0.0
        %591 = vmatpush1.msra.mxu0 0.0
        %592 = vmatprep.subr.mxu0 0.0
        %593 = vmatpush1.msra.mxu0 0.0
        %594 = vmatprep.subr.mxu0 0.0
        %595 = vmatpush1.msra.mxu0 0.0
        %596 = vmatprep.subr.mxu0 0.0
        %597 = vmatpush1.msra.mxu0 0.0
        %598 = vmatprep.subr.mxu0 0.0
        %599 = vmatpush1.msra.mxu0 0.0
        %600 = vmatprep.subr.mxu0 0.0
        %601 = vmatpush1.msra.mxu0 0.0
        %602 = vmatprep.subr.mxu0 0.0
        %603 = vmatpush1.msra.mxu0 0.0
        %604 = vmatprep.subr.mxu0 0.0
        %605 = vmatpush1.msra.mxu0 %v497
        %606 = vmatprep.subr.mxu0 0.0
        %607 = vmatpush1.msra.mxu0 %v496
        %608 = vmatprep.subr.mxu0 0.0
        %609 = vmatpush1.msra.mxu0 %v495
        %610 = vmatprep.subr.mxu0 0.0
        %611 = vmatpush1.msra.mxu0 %v494
        %612 = vmatprep.subr.mxu0 0.0
        %613 = vmatpush2.msra.mxu0 0.0
        %614 = vmatprep.subr.mxu0 0.0
        %615 = vmatpush2.msra.mxu0 0.0
        %616 = vmatprep.subr.mxu0 0.0
        %617 = vmatpush2.msra.mxu0 0.0
        %618 = vmatprep.subr.mxu0 0.0
        %619 = vmatpush2.msra.mxu0 0.0
        %620 = vmatprep.subr.mxu0 0.0
        %621 = vmatpush2.msra.mxu0 0.0
        %622 = vmatprep.subr.mxu0 0.0
        %623 = vmatpush2.msra.mxu0 0.0
        %624 = vmatprep.subr.mxu0 0.0
        %625 = vmatpush2.msra.mxu0 0.0
        %626 = vmatprep.subr.mxu0 0.0
        %627 = vmatpush2.msra.mxu0 0.0
        %628 = vmatprep.subr.mxu0 0.0
        %629 = vmatpush2.msra.mxu0 0.0
        %630 = vmatprep.subr.mxu0 0.0
        %631 = vmatpush2.msra.mxu0 0.0
        %632 = vmatprep.subr.mxu0 0.0
        %633 = vmatpush2.msra.mxu0 0.0
        %634 = vmatprep.subr.mxu0 0.0
        %635 = vmatpush2.msra.mxu0 0.0
        %636 = vmatprep.subr.mxu0 0.0
        %637 = vmatpush2.msra.mxu0 0.0
        %638 = vmatprep.subr.mxu0 0.0
        %639 = vmatpush2.msra.mxu0 0.0
        %640 = vmatprep.subr.mxu0 0.0
        %641 = vmatpush2.msra.mxu0 0.0
        %642 = vmatprep.subr.mxu0 0.0
        %643 = vmatpush2.msra.mxu0 0.0
        %644 = vmatprep.mubr.f32.mxu0 0.0
        %645 = vmatmul.mubr.f32.gmra.mxu0 %v578
        %v646 = vpop.f32.mrf.mxu0
        %v647 = vadd.f32 %v575, %v646
        %v648 = vpop.f32.mrf.mxu0
        %649 = vdwg.mxu0
        %s650 = scalar_lea.vmem %s3, 64
        %v651 = vld [vmem:[%s650] sm:$0xff]
        %v652 = vld [vmem:[%s650 + $0x8] sm:$0xff]
        %v653 = vld [vmem:[%s650 + $0x10] sm:$0xff]
        %v654 = vld [vmem:[%s650 + $0x18] sm:$0xff]
        %v655 = vrot.slane %v486, 2
        %v656 = vsel %vm505, %v655, 0
        %658 = vmatprep.subr.mxu0 0.0
        %659 = vmatpush1.msra.mxu0 0.0
        %660 = vmatprep.subr.mxu0 0.0
        %661 = vmatpush1.msra.mxu0 0.0
        %662 = vmatprep.subr.mxu0 0.0
        %663 = vmatpush1.msra.mxu0 0.0
        %664 = vmatprep.subr.mxu0 0.0
        %665 = vmatpush1.msra.mxu0 0.0
        %666 = vmatprep.subr.mxu0 0.0
        %667 = vmatpush1.msra.mxu0 0.0
        %668 = vmatprep.subr.mxu0 0.0
        %669 = vmatpush1.msra.mxu0 0.0
        %670 = vmatprep.subr.mxu0 0.0
        %671 = vmatpush1.msra.mxu0 0.0
        %672 = vmatprep.subr.mxu0 0.0
        %673 = vmatpush1.msra.mxu0 0.0
        %674 = vmatprep.subr.mxu0 0.0
        %675 = vmatpush1.msra.mxu0 0.0
        %676 = vmatprep.subr.mxu0 0.0
        %677 = vmatpush1.msra.mxu0 0.0
        %678 = vmatprep.subr.mxu0 0.0
        %679 = vmatpush1.msra.mxu0 0.0
        %680 = vmatprep.subr.mxu0 0.0
        %681 = vmatpush1.msra.mxu0 0.0
        %682 = vmatprep.subr.mxu0 0.0
        %683 = vmatpush1.msra.mxu0 %v654
        %684 = vmatprep.subr.mxu0 0.0
        %685 = vmatpush1.msra.mxu0 %v653
        %686 = vmatprep.subr.mxu0 0.0
        %687 = vmatpush1.msra.mxu0 %v652
        %688 = vmatprep.subr.mxu0 0.0
        %689 = vmatpush1.msra.mxu0 %v651
        %690 = vmatprep.subr.mxu0 0.0
        %691 = vmatpush2.msra.mxu0 0.0
        %692 = vmatprep.subr.mxu0 0.0
        %693 = vmatpush2.msra.mxu0 0.0
        %694 = vmatprep.subr.mxu0 0.0
        %695 = vmatpush2.msra.mxu0 0.0
        %696 = vmatprep.subr.mxu0 0.0
        %697 = vmatpush2.msra.mxu0 0.0
        %698 = vmatprep.subr.mxu0 0.0
        %699 = vmatpush2.msra.mxu0 0.0
        %700 = vmatprep.subr.mxu0 0.0
        %701 = vmatpush2.msra.mxu0 0.0
        %702 = vmatprep.subr.mxu0 0.0
        %703 = vmatpush2.msra.mxu0 0.0
        %704 = vmatprep.subr.mxu0 0.0
        %705 = vmatpush2.msra.mxu0 0.0
        %706 = vmatprep.subr.mxu0 0.0
        %707 = vmatpush2.msra.mxu0 0.0
        %708 = vmatprep.subr.mxu0 0.0
        %709 = vmatpush2.msra.mxu0 0.0
        %710 = vmatprep.subr.mxu0 0.0
        %711 = vmatpush2.msra.mxu0 0.0
        %712 = vmatprep.subr.mxu0 0.0
        %713 = vmatpush2.msra.mxu0 0.0
        %714 = vmatprep.subr.mxu0 0.0
        %715 = vmatpush2.msra.mxu0 0.0
        %716 = vmatprep.subr.mxu0 0.0
        %717 = vmatpush2.msra.mxu0 0.0
        %718 = vmatprep.subr.mxu0 0.0
        %719 = vmatpush2.msra.mxu0 0.0
        %720 = vmatprep.subr.mxu0 0.0
        %721 = vmatpush2.msra.mxu0 0.0
        %722 = vmatprep.mubr.f32.mxu0 0.0
        %723 = vmatmul.mubr.f32.gmra.mxu0 %v656
        %v724 = vpop.f32.mrf.mxu0
        %v725 = vadd.f32 0.0, %v724
        %v726 = vpop.f32.mrf.mxu0
        %727 = vdwg.mxu0
        %v728 = vadd.f32 %v647, %v725
        %s729 = scalar_lea.vmem %s3, 96
        %v730 = vld [vmem:[%s729] sm:$0xff]
        %v731 = vld [vmem:[%s729 + $0x8] sm:$0xff]
        %v732 = vld [vmem:[%s729 + $0x10] sm:$0xff]
        %v733 = vld [vmem:[%s729 + $0x18] sm:$0xff]
        %v734 = vrot.slane %v486, 3
        %v735 = vsel %vm505, %v734, 0
        %737 = vmatprep.subr.mxu0 0.0
        %738 = vmatpush1.msra.mxu0 0.0
        %739 = vmatprep.subr.mxu0 0.0
        %740 = vmatpush1.msra.mxu0 0.0
        %741 = vmatprep.subr.mxu0 0.0
        %742 = vmatpush1.msra.mxu0 0.0
        %743 = vmatprep.subr.mxu0 0.0
        %744 = vmatpush1.msra.mxu0 0.0
        %745 = vmatprep.subr.mxu0 0.0
        %746 = vmatpush1.msra.mxu0 0.0
        %747 = vmatprep.subr.mxu0 0.0
        %748 = vmatpush1.msra.mxu0 0.0
        %749 = vmatprep.subr.mxu0 0.0
        %750 = vmatpush1.msra.mxu0 0.0
        %751 = vmatprep.subr.mxu0 0.0
        %752 = vmatpush1.msra.mxu0 0.0
        %753 = vmatprep.subr.mxu0 0.0
        %754 = vmatpush1.msra.mxu0 0.0
        %755 = vmatprep.subr.mxu0 0.0
        %756 = vmatpush1.msra.mxu0 0.0
        %757 = vmatprep.subr.mxu0 0.0
        %758 = vmatpush1.msra.mxu0 0.0
        %759 = vmatprep.subr.mxu0 0.0
        %760 = vmatpush1.msra.mxu0 0.0
        %761 = vmatprep.subr.mxu0 0.0
        %762 = vmatpush1.msra.mxu0 %v733
        %763 = vmatprep.subr.mxu0 0.0
        %764 = vmatpush1.msra.mxu0 %v732
        %765 = vmatprep.subr.mxu0 0.0
        %766 = vmatpush1.msra.mxu0 %v731
        %767 = vmatprep.subr.mxu0 0.0
        %768 = vmatpush1.msra.mxu0 %v730
        %769 = vmatprep.subr.mxu0 0.0
        %770 = vmatpush2.msra.mxu0 0.0
        %771 = vmatprep.subr.mxu0 0.0
        %772 = vmatpush2.msra.mxu0 0.0
        %773 = vmatprep.subr.mxu0 0.0
        %774 = vmatpush2.msra.mxu0 0.0
        %775 = vmatprep.subr.mxu0 0.0
        %776 = vmatpush2.msra.mxu0 0.0
        %777 = vmatprep.subr.mxu0 0.0
        %778 = vmatpush2.msra.mxu0 0.0
        %779 = vmatprep.subr.mxu0 0.0
        %780 = vmatpush2.msra.mxu0 0.0
        %781 = vmatprep.subr.mxu0 0.0
        %782 = vmatpush2.msra.mxu0 0.0
        %783 = vmatprep.subr.mxu0 0.0
        %784 = vmatpush2.msra.mxu0 0.0
        %785 = vmatprep.subr.mxu0 0.0
        %786 = vmatpush2.msra.mxu0 0.0
        %787 = vmatprep.subr.mxu0 0.0
        %788 = vmatpush2.msra.mxu0 0.0
        %789 = vmatprep.subr.mxu0 0.0
        %790 = vmatpush2.msra.mxu0 0.0
        %791 = vmatprep.subr.mxu0 0.0
        %792 = vmatpush2.msra.mxu0 0.0
        %793 = vmatprep.subr.mxu0 0.0
        %794 = vmatpush2.msra.mxu0 0.0
        %795 = vmatprep.subr.mxu0 0.0
        %796 = vmatpush2.msra.mxu0 0.0
        %797 = vmatprep.subr.mxu0 0.0
        %798 = vmatpush2.msra.mxu0 0.0
        %799 = vmatprep.subr.mxu0 0.0
        %800 = vmatpush2.msra.mxu0 0.0
        %801 = vmatprep.mubr.f32.mxu0 0.0
        %802 = vmatmul.mubr.f32.gmra.mxu0 %v735
        %v803 = vpop.f32.mrf.mxu0
        %v804 = vadd.f32 0.0, %v803
        %v805 = vpop.f32.mrf.mxu0
        %806 = vdwg.mxu0
        %v807 = vadd.f32 %v728, %v804
        %s808 = scalar_lea.vmem %s3, 128
        %v809 = vld [vmem:[%s808] sm:$0xff]
        %v810 = vld [vmem:[%s808 + $0x8] sm:$0xff]
        %v811 = vld [vmem:[%s808 + $0x10] sm:$0xff]
        %v812 = vld [vmem:[%s808 + $0x18] sm:$0xff]
        %v813 = vrot.slane %v486, 4
        %v814 = vsel %vm505, %v813, 0
        %816 = vmatprep.subr.mxu0 0.0
        %817 = vmatpush1.msra.mxu0 0.0
        %818 = vmatprep.subr.mxu0 0.0
        %819 = vmatpush1.msra.mxu0 0.0
        %820 = vmatprep.subr.mxu0 0.0
        %821 = vmatpush1.msra.mxu0 0.0
        %822 = vmatprep.subr.mxu0 0.0
        %823 = vmatpush1.msra.mxu0 0.0
        %824 = vmatprep.subr.mxu0 0.0
        %825 = vmatpush1.msra.mxu0 0.0
        %826 = vmatprep.subr.mxu0 0.0
        %827 = vmatpush1.msra.mxu0 0.0
        %828 = vmatprep.subr.mxu0 0.0
        %829 = vmatpush1.msra.mxu0 0.0
        %830 = vmatprep.subr.mxu0 0.0
        %831 = vmatpush1.msra.mxu0 0.0
        %832 = vmatprep.subr.mxu0 0.0
        %833 = vmatpush1.msra.mxu0 0.0
        %834 = vmatprep.subr.mxu0 0.0
        %835 = vmatpush1.msra.mxu0 0.0
        %836 = vmatprep.subr.mxu0 0.0
        %837 = vmatpush1.msra.mxu0 0.0
        %838 = vmatprep.subr.mxu0 0.0
        %839 = vmatpush1.msra.mxu0 0.0
        %840 = vmatprep.subr.mxu0 0.0
        %841 = vmatpush1.msra.mxu0 %v812
        %842 = vmatprep.subr.mxu0 0.0
        %843 = vmatpush1.msra.mxu0 %v811
        %844 = vmatprep.subr.mxu0 0.0
        %845 = vmatpush1.msra.mxu0 %v810
        %846 = vmatprep.subr.mxu0 0.0
        %847 = vmatpush1.msra.mxu0 %v809
        %848 = vmatprep.subr.mxu0 0.0
        %849 = vmatpush2.msra.mxu0 0.0
        %850 = vmatprep.subr.mxu0 0.0
        %851 = vmatpush2.msra.mxu0 0.0
        %852 = vmatprep.subr.mxu0 0.0
        %853 = vmatpush2.msra.mxu0 0.0
        %854 = vmatprep.subr.mxu0 0.0
        %855 = vmatpush2.msra.mxu0 0.0
        %856 = vmatprep.subr.mxu0 0.0
        %857 = vmatpush2.msra.mxu0 0.0
        %858 = vmatprep.subr.mxu0 0.0
        %859 = vmatpush2.msra.mxu0 0.0
        %860 = vmatprep.subr.mxu0 0.0
        %861 = vmatpush2.msra.mxu0 0.0
        %862 = vmatprep.subr.mxu0 0.0
        %863 = vmatpush2.msra.mxu0 0.0
        %864 = vmatprep.subr.mxu0 0.0
        %865 = vmatpush2.msra.mxu0 0.0
        %866 = vmatprep.subr.mxu0 0.0
        %867 = vmatpush2.msra.mxu0 0.0
        %868 = vmatprep.subr.mxu0 0.0
        %869 = vmatpush2.msra.mxu0 0.0
        %870 = vmatprep.subr.mxu0 0.0
        %871 = vmatpush2.msra.mxu0 0.0
        %872 = vmatprep.subr.mxu0 0.0
        %873 = vmatpush2.msra.mxu0 0.0
        %874 = vmatprep.subr.mxu0 0.0
        %875 = vmatpush2.msra.mxu0 0.0
        %876 = vmatprep.subr.mxu0 0.0
        %877 = vmatpush2.msra.mxu0 0.0
        %878 = vmatprep.subr.mxu0 0.0
        %879 = vmatpush2.msra.mxu0 0.0
        %880 = vmatprep.mubr.f32.mxu0 0.0
        %881 = vmatmul.mubr.f32.gmra.mxu0 %v814
        %v882 = vpop.f32.mrf.mxu0
        %v883 = vadd.f32 0.0, %v882
        %v884 = vpop.f32.mrf.mxu0
        %885 = vdwg.mxu0
        %v886 = vadd.f32 %v807, %v883
        %s887 = scalar_lea.vmem %s3, 160
        %v888 = vld [vmem:[%s887] sm:$0xff]
        %v889 = vld [vmem:[%s887 + $0x8] sm:$0xff]
        %v890 = vld [vmem:[%s887 + $0x10] sm:$0xff]
        %v891 = vld [vmem:[%s887 + $0x18] sm:$0xff]
        %v892 = vrot.slane %v486, 5
        %v893 = vsel %vm505, %v892, 0
        %895 = vmatprep.subr.mxu0 0.0
        %896 = vmatpush1.msra.mxu0 0.0
        %897 = vmatprep.subr.mxu0 0.0
        %898 = vmatpush1.msra.mxu0 0.0
        %899 = vmatprep.subr.mxu0 0.0
        %900 = vmatpush1.msra.mxu0 0.0
        %901 = vmatprep.subr.mxu0 0.0
        %902 = vmatpush1.msra.mxu0 0.0
        %903 = vmatprep.subr.mxu0 0.0
        %904 = vmatpush1.msra.mxu0 0.0
        %905 = vmatprep.subr.mxu0 0.0
        %906 = vmatpush1.msra.mxu0 0.0
        %907 = vmatprep.subr.mxu0 0.0
        %908 = vmatpush1.msra.mxu0 0.0
        %909 = vmatprep.subr.mxu0 0.0
        %910 = vmatpush1.msra.mxu0 0.0
        %911 = vmatprep.subr.mxu0 0.0
        %912 = vmatpush1.msra.mxu0 0.0
        %913 = vmatprep.subr.mxu0 0.0
        %914 = vmatpush1.msra.mxu0 0.0
        %915 = vmatprep.subr.mxu0 0.0
        %916 = vmatpush1.msra.mxu0 0.0
        %917 = vmatprep.subr.mxu0 0.0
        %918 = vmatpush1.msra.mxu0 0.0
        %919 = vmatprep.subr.mxu0 0.0
        %920 = vmatpush1.msra.mxu0 %v891
        %921 = vmatprep.subr.mxu0 0.0
        %922 = vmatpush1.msra.mxu0 %v890
        %923 = vmatprep.subr.mxu0 0.0
        %924 = vmatpush1.msra.mxu0 %v889
        %925 = vmatprep.subr.mxu0 0.0
        %926 = vmatpush1.msra.mxu0 %v888
        %927 = vmatprep.subr.mxu0 0.0
        %928 = vmatpush2.msra.mxu0 0.0
        %929 = vmatprep.subr.mxu0 0.0
        %930 = vmatpush2.msra.mxu0 0.0
        %931 = vmatprep.subr.mxu0 0.0
        %932 = vmatpush2.msra.mxu0 0.0
        %933 = vmatprep.subr.mxu0 0.0
        %934 = vmatpush2.msra.mxu0 0.0
        %935 = vmatprep.subr.mxu0 0.0
        %936 = vmatpush2.msra.mxu0 0.0
        %937 = vmatprep.subr.mxu0 0.0
        %938 = vmatpush2.msra.mxu0 0.0
        %939 = vmatprep.subr.mxu0 0.0
        %940 = vmatpush2.msra.mxu0 0.0
        %941 = vmatprep.subr.mxu0 0.0
        %942 = vmatpush2.msra.mxu0 0.0
        %943 = vmatprep.subr.mxu0 0.0
        %944 = vmatpush2.msra.mxu0 0.0
        %945 = vmatprep.subr.mxu0 0.0
        %946 = vmatpush2.msra.mxu0 0.0
        %947 = vmatprep.subr.mxu0 0.0
        %948 = vmatpush2.msra.mxu0 0.0
        %949 = vmatprep.subr.mxu0 0.0
        %950 = vmatpush2.msra.mxu0 0.0
        %951 = vmatprep.subr.mxu0 0.0
        %952 = vmatpush2.msra.mxu0 0.0
        %953 = vmatprep.subr.mxu0 0.0
        %954 = vmatpush2.msra.mxu0 0.0
        %955 = vmatprep.subr.mxu0 0.0
        %956 = vmatpush2.msra.mxu0 0.0
        %957 = vmatprep.subr.mxu0 0.0
        %958 = vmatpush2.msra.mxu0 0.0
        %959 = vmatprep.mubr.f32.mxu0 0.0
        %960 = vmatmul.mubr.f32.gmra.mxu0 %v893
        %v961 = vpop.f32.mrf.mxu0
        %v962 = vadd.f32 0.0, %v961
        %v963 = vpop.f32.mrf.mxu0
        %964 = vdwg.mxu0
        %v965 = vadd.f32 %v886, %v962
        %s966 = scalar_lea.vmem %s3, 192
        %v967 = vld [vmem:[%s966] sm:$0xff]
        %v968 = vld [vmem:[%s966 + $0x8] sm:$0xff]
        %v969 = vld [vmem:[%s966 + $0x10] sm:$0xff]
        %v970 = vld [vmem:[%s966 + $0x18] sm:$0xff]
        %v971 = vrot.slane %v486, 6
        %v972 = vsel %vm505, %v971, 0
        %974 = vmatprep.subr.mxu0 0.0
        %975 = vmatpush1.msra.mxu0 0.0
        %976 = vmatprep.subr.mxu0 0.0
        %977 = vmatpush1.msra.mxu0 0.0
        %978 = vmatprep.subr.mxu0 0.0
        %979 = vmatpush1.msra.mxu0 0.0
        %980 = vmatprep.subr.mxu0 0.0
        %981 = vmatpush1.msra.mxu0 0.0
        %982 = vmatprep.subr.mxu0 0.0
        %983 = vmatpush1.msra.mxu0 0.0
        %984 = vmatprep.subr.mxu0 0.0
        %985 = vmatpush1.msra.mxu0 0.0
        %986 = vmatprep.subr.mxu0 0.0
        %987 = vmatpush1.msra.mxu0 0.0
        %988 = vmatprep.subr.mxu0 0.0
        %989 = vmatpush1.msra.mxu0 0.0
        %990 = vmatprep.subr.mxu0 0.0
        %991 = vmatpush1.msra.mxu0 0.0
        %992 = vmatprep.subr.mxu0 0.0
        %993 = vmatpush1.msra.mxu0 0.0
        %994 = vmatprep.subr.mxu0 0.0
        %995 = vmatpush1.msra.mxu0 0.0
        %996 = vmatprep.subr.mxu0 0.0
        %997 = vmatpush1.msra.mxu0 0.0
        %998 = vmatprep.subr.mxu0 0.0
        %999 = vmatpush1.msra.mxu0 %v970
        %1000 = vmatprep.subr.mxu0 0.0
        %1001 = vmatpush1.msra.mxu0 %v969
        %1002 = vmatprep.subr.mxu0 0.0
        %1003 = vmatpush1.msra.mxu0 %v968
        %1004 = vmatprep.subr.mxu0 0.0
        %1005 = vmatpush1.msra.mxu0 %v967
        %1006 = vmatprep.subr.mxu0 0.0
        %1007 = vmatpush2.msra.mxu0 0.0
        %1008 = vmatprep.subr.mxu0 0.0
        %1009 = vmatpush2.msra.mxu0 0.0
        %1010 = vmatprep.subr.mxu0 0.0
        %1011 = vmatpush2.msra.mxu0 0.0
        %1012 = vmatprep.subr.mxu0 0.0
        %1013 = vmatpush2.msra.mxu0 0.0
        %1014 = vmatprep.subr.mxu0 0.0
        %1015 = vmatpush2.msra.mxu0 0.0
        %1016 = vmatprep.subr.mxu0 0.0
        %1017 = vmatpush2.msra.mxu0 0.0
        %1018 = vmatprep.subr.mxu0 0.0
        %1019 = vmatpush2.msra.mxu0 0.0
        %1020 = vmatprep.subr.mxu0 0.0
        %1021 = vmatpush2.msra.mxu0 0.0
        %1022 = vmatprep.subr.mxu0 0.0
        %1023 = vmatpush2.msra.mxu0 0.0
        %1024 = vmatprep.subr.mxu0 0.0
        %1025 = vmatpush2.msra.mxu0 0.0
        %1026 = vmatprep.subr.mxu0 0.0
        %1027 = vmatpush2.msra.mxu0 0.0
        %1028 = vmatprep.subr.mxu0 0.0
        %1029 = vmatpush2.msra.mxu0 0.0
        %1030 = vmatprep.subr.mxu0 0.0
        %1031 = vmatpush2.msra.mxu0 0.0
        %1032 = vmatprep.subr.mxu0 0.0
        %1033 = vmatpush2.msra.mxu0 0.0
        %1034 = vmatprep.subr.mxu0 0.0
        %1035 = vmatpush2.msra.mxu0 0.0
        %1036 = vmatprep.subr.mxu0 0.0
        %1037 = vmatpush2.msra.mxu0 0.0
        %1038 = vmatprep.mubr.f32.mxu0 0.0
        %1039 = vmatmul.mubr.f32.gmra.mxu0 %v972
        %v1040 = vpop.f32.mrf.mxu0
        %v1041 = vadd.f32 0.0, %v1040
        %v1042 = vpop.f32.mrf.mxu0
        %1043 = vdwg.mxu0
        %v1044 = vadd.f32 %v965, %v1041
        %s1045 = scalar_lea.vmem %s3, 224
        %v1046 = vld [vmem:[%s1045] sm:$0xff]
        %v1047 = vld [vmem:[%s1045 + $0x8] sm:$0xff]
        %v1048 = vld [vmem:[%s1045 + $0x10] sm:$0xff]
        %v1049 = vld [vmem:[%s1045 + $0x18] sm:$0xff]
        %v1050 = vrot.slane %v486, 7
        %v1051 = vsel %vm505, %v1050, 0
        %1053 = vmatprep.subr.mxu0 0.0
        %1054 = vmatpush1.msra.mxu0 0.0
        %1055 = vmatprep.subr.mxu0 0.0
        %1056 = vmatpush1.msra.mxu0 0.0
        %1057 = vmatprep.subr.mxu0 0.0
        %1058 = vmatpush1.msra.mxu0 0.0
        %1059 = vmatprep.subr.mxu0 0.0
        %1060 = vmatpush1.msra.mxu0 0.0
        %1061 = vmatprep.subr.mxu0 0.0
        %1062 = vmatpush1.msra.mxu0 0.0
        %1063 = vmatprep.subr.mxu0 0.0
        %1064 = vmatpush1.msra.mxu0 0.0
        %1065 = vmatprep.subr.mxu0 0.0
        %1066 = vmatpush1.msra.mxu0 0.0
        %1067 = vmatprep.subr.mxu0 0.0
        %1068 = vmatpush1.msra.mxu0 0.0
        %1069 = vmatprep.subr.mxu0 0.0
        %1070 = vmatpush1.msra.mxu0 0.0
        %1071 = vmatprep.subr.mxu0 0.0
        %1072 = vmatpush1.msra.mxu0 0.0
        %1073 = vmatprep.subr.mxu0 0.0
        %1074 = vmatpush1.msra.mxu0 0.0
        %1075 = vmatprep.subr.mxu0 0.0
        %1076 = vmatpush1.msra.mxu0 0.0
        %1077 = vmatprep.subr.mxu0 0.0
        %1078 = vmatpush1.msra.mxu0 %v1049
        %1079 = vmatprep.subr.mxu0 0.0
        %1080 = vmatpush1.msra.mxu0 %v1048
        %1081 = vmatprep.subr.mxu0 0.0
        %1082 = vmatpush1.msra.mxu0 %v1047
        %1083 = vmatprep.subr.mxu0 0.0
        %1084 = vmatpush1.msra.mxu0 %v1046
        %1085 = vmatprep.subr.mxu0 0.0
        %1086 = vmatpush2.msra.mxu0 0.0
        %1087 = vmatprep.subr.mxu0 0.0
        %1088 = vmatpush2.msra.mxu0 0.0
        %1089 = vmatprep.subr.mxu0 0.0
        %1090 = vmatpush2.msra.mxu0 0.0
        %1091 = vmatprep.subr.mxu0 0.0
        %1092 = vmatpush2.msra.mxu0 0.0
        %1093 = vmatprep.subr.mxu0 0.0
        %1094 = vmatpush2.msra.mxu0 0.0
        %1095 = vmatprep.subr.mxu0 0.0
        %1096 = vmatpush2.msra.mxu0 0.0
        %1097 = vmatprep.subr.mxu0 0.0
        %1098 = vmatpush2.msra.mxu0 0.0
        %1099 = vmatprep.subr.mxu0 0.0
        %1100 = vmatpush2.msra.mxu0 0.0
        %1101 = vmatprep.subr.mxu0 0.0
        %1102 = vmatpush2.msra.mxu0 0.0
        %1103 = vmatprep.subr.mxu0 0.0
        %1104 = vmatpush2.msra.mxu0 0.0
        %1105 = vmatprep.subr.mxu0 0.0
        %1106 = vmatpush2.msra.mxu0 0.0
        %1107 = vmatprep.subr.mxu0 0.0
        %1108 = vmatpush2.msra.mxu0 0.0
        %1109 = vmatprep.subr.mxu0 0.0
        %1110 = vmatpush2.msra.mxu0 0.0
        %1111 = vmatprep.subr.mxu0 0.0
        %1112 = vmatpush2.msra.mxu0 0.0
        %1113 = vmatprep.subr.mxu0 0.0
        %1114 = vmatpush2.msra.mxu0 0.0
        %1115 = vmatprep.subr.mxu0 0.0
        %1116 = vmatpush2.msra.mxu0 0.0
        %1117 = vmatprep.mubr.f32.mxu0 0.0
        %1118 = vmatmul.mubr.f32.gmra.mxu0 %v1051
        %v1119 = vpop.f32.mrf.mxu0
        %v1120 = vadd.f32 0.0, %v1119
        %v1121 = vpop.f32.mrf.mxu0
        %1122 = vdwg.mxu0
        %v1123 = vadd.f32 %v1044, %v1120
        %s1124 = scalar_lea.vmem %s3, 256
        %v1125 = vld [vmem:[%s1124] sm:$0xff]
        %v1126 = vld [vmem:[%s1124 + $0x8] sm:$0xff]
        %v1127 = vld [vmem:[%s1124 + $0x10] sm:$0xff]
        %v1128 = vld [vmem:[%s1124 + $0x18] sm:$0xff]
        %v1130 = vsel %vm505, %v491, 0
        %1132 = vmatprep.subr.mxu0 0.0
        %1133 = vmatpush1.msra.mxu0 0.0
        %1134 = vmatprep.subr.mxu0 0.0
        %1135 = vmatpush1.msra.mxu0 0.0
        %1136 = vmatprep.subr.mxu0 0.0
        %1137 = vmatpush1.msra.mxu0 0.0
        %1138 = vmatprep.subr.mxu0 0.0
        %1139 = vmatpush1.msra.mxu0 0.0
        %1140 = vmatprep.subr.mxu0 0.0
        %1141 = vmatpush1.msra.mxu0 0.0
        %1142 = vmatprep.subr.mxu0 0.0
        %1143 = vmatpush1.msra.mxu0 0.0
        %1144 = vmatprep.subr.mxu0 0.0
        %1145 = vmatpush1.msra.mxu0 0.0
        %1146 = vmatprep.subr.mxu0 0.0
        %1147 = vmatpush1.msra.mxu0 0.0
        %1148 = vmatprep.subr.mxu0 0.0
        %1149 = vmatpush1.msra.mxu0 0.0
        %1150 = vmatprep.subr.mxu0 0.0
        %1151 = vmatpush1.msra.mxu0 0.0
        %1152 = vmatprep.subr.mxu0 0.0
        %1153 = vmatpush1.msra.mxu0 0.0
        %1154 = vmatprep.subr.mxu0 0.0
        %1155 = vmatpush1.msra.mxu0 0.0
        %1156 = vmatprep.subr.mxu0 0.0
        %1157 = vmatpush1.msra.mxu0 %v1128
        %1158 = vmatprep.subr.mxu0 0.0
        %1159 = vmatpush1.msra.mxu0 %v1127
        %1160 = vmatprep.subr.mxu0 0.0
        %1161 = vmatpush1.msra.mxu0 %v1126
        %1162 = vmatprep.subr.mxu0 0.0
        %1163 = vmatpush1.msra.mxu0 %v1125
        %1164 = vmatprep.subr.mxu0 0.0
        %1165 = vmatpush2.msra.mxu0 0.0
        %1166 = vmatprep.subr.mxu0 0.0
        %1167 = vmatpush2.msra.mxu0 0.0
        %1168 = vmatprep.subr.mxu0 0.0
        %1169 = vmatpush2.msra.mxu0 0.0
        %1170 = vmatprep.subr.mxu0 0.0
        %1171 = vmatpush2.msra.mxu0 0.0
        %1172 = vmatprep.subr.mxu0 0.0
        %1173 = vmatpush2.msra.mxu0 0.0
        %1174 = vmatprep.subr.mxu0 0.0
        %1175 = vmatpush2.msra.mxu0 0.0
        %1176 = vmatprep.subr.mxu0 0.0
        %1177 = vmatpush2.msra.mxu0 0.0
        %1178 = vmatprep.subr.mxu0 0.0
        %1179 = vmatpush2.msra.mxu0 0.0
        %1180 = vmatprep.subr.mxu0 0.0
        %1181 = vmatpush2.msra.mxu0 0.0
        %1182 = vmatprep.subr.mxu0 0.0
        %1183 = vmatpush2.msra.mxu0 0.0
        %1184 = vmatprep.subr.mxu0 0.0
        %1185 = vmatpush2.msra.mxu0 0.0
        %1186 = vmatprep.subr.mxu0 0.0
        %1187 = vmatpush2.msra.mxu0 0.0
        %1188 = vmatprep.subr.mxu0 0.0
        %1189 = vmatpush2.msra.mxu0 0.0
        %1190 = vmatprep.subr.mxu0 0.0
        %1191 = vmatpush2.msra.mxu0 0.0
        %1192 = vmatprep.subr.mxu0 0.0
        %1193 = vmatpush2.msra.mxu0 0.0
        %1194 = vmatprep.subr.mxu0 0.0
        %1195 = vmatpush2.msra.mxu0 0.0
        %1196 = vmatprep.mubr.f32.mxu0 0.0
        %1197 = vmatmul.mubr.f32.gmra.mxu0 %v1130
        %v1198 = vpop.f32.mrf.mxu0
        %v1199 = vadd.f32 0.0, %v1198
        %v1200 = vpop.f32.mrf.mxu0
        %1201 = vdwg.mxu0
        %v1202 = vadd.f32 %v1123, %v1199
        %s1203 = scalar_lea.vmem %s3, 288
        %v1204 = vld [vmem:[%s1203] sm:$0xff]
        %v1205 = vld [vmem:[%s1203 + $0x8] sm:$0xff]
        %v1206 = vld [vmem:[%s1203 + $0x10] sm:$0xff]
        %v1207 = vld [vmem:[%s1203 + $0x18] sm:$0xff]
        %v1208 = vrot.slane %v491, 1
        %v1209 = vsel %vm505, %v1208, 0
        %1211 = vmatprep.subr.mxu0 0.0
        %1212 = vmatpush1.msra.mxu0 0.0
        %1213 = vmatprep.subr.mxu0 0.0
        %1214 = vmatpush1.msra.mxu0 0.0
        %1215 = vmatprep.subr.mxu0 0.0
        %1216 = vmatpush1.msra.mxu0 0.0
        %1217 = vmatprep.subr.mxu0 0.0
        %1218 = vmatpush1.msra.mxu0 0.0
        %1219 = vmatprep.subr.mxu0 0.0
        %1220 = vmatpush1.msra.mxu0 0.0
        %1221 = vmatprep.subr.mxu0 0.0
        %1222 = vmatpush1.msra.mxu0 0.0
        %1223 = vmatprep.subr.mxu0 0.0
        %1224 = vmatpush1.msra.mxu0 0.0
        %1225 = vmatprep.subr.mxu0 0.0
        %1226 = vmatpush1.msra.mxu0 0.0
        %1227 = vmatprep.subr.mxu0 0.0
        %1228 = vmatpush1.msra.mxu0 0.0
        %1229 = vmatprep.subr.mxu0 0.0
        %1230 = vmatpush1.msra.mxu0 0.0
        %1231 = vmatprep.subr.mxu0 0.0
        %1232 = vmatpush1.msra.mxu0 0.0
        %1233 = vmatprep.subr.mxu0 0.0
        %1234 = vmatpush1.msra.mxu0 0.0
        %1235 = vmatprep.subr.mxu0 0.0
        %1236 = vmatpush1.msra.mxu0 %v1207
        %1237 = vmatprep.subr.mxu0 0.0
        %1238 = vmatpush1.msra.mxu0 %v1206
        %1239 = vmatprep.subr.mxu0 0.0
        %1240 = vmatpush1.msra.mxu0 %v1205
        %1241 = vmatprep.subr.mxu0 0.0
        %1242 = vmatpush1.msra.mxu0 %v1204
        %1243 = vmatprep.subr.mxu0 0.0
        %1244 = vmatpush2.msra.mxu0 0.0
        %1245 = vmatprep.subr.mxu0 0.0
        %1246 = vmatpush2.msra.mxu0 0.0
        %1247 = vmatprep.subr.mxu0 0.0
        %1248 = vmatpush2.msra.mxu0 0.0
        %1249 = vmatprep.subr.mxu0 0.0
        %1250 = vmatpush2.msra.mxu0 0.0
        %1251 = vmatprep.subr.mxu0 0.0
        %1252 = vmatpush2.msra.mxu0 0.0
        %1253 = vmatprep.subr.mxu0 0.0
        %1254 = vmatpush2.msra.mxu0 0.0
        %1255 = vmatprep.subr.mxu0 0.0
        %1256 = vmatpush2.msra.mxu0 0.0
        %1257 = vmatprep.subr.mxu0 0.0
        %1258 = vmatpush2.msra.mxu0 0.0
        %1259 = vmatprep.subr.mxu0 0.0
        %1260 = vmatpush2.msra.mxu0 0.0
        %1261 = vmatprep.subr.mxu0 0.0
        %1262 = vmatpush2.msra.mxu0 0.0
        %1263 = vmatprep.subr.mxu0 0.0
        %1264 = vmatpush2.msra.mxu0 0.0
        %1265 = vmatprep.subr.mxu0 0.0
        %1266 = vmatpush2.msra.mxu0 0.0
        %1267 = vmatprep.subr.mxu0 0.0
        %1268 = vmatpush2.msra.mxu0 0.0
        %1269 = vmatprep.subr.mxu0 0.0
        %1270 = vmatpush2.msra.mxu0 0.0
        %1271 = vmatprep.subr.mxu0 0.0
        %1272 = vmatpush2.msra.mxu0 0.0
        %1273 = vmatprep.subr.mxu0 0.0
        %1274 = vmatpush2.msra.mxu0 0.0
        %1275 = vmatprep.mubr.f32.mxu0 0.0
        %1276 = vmatmul.mubr.f32.gmra.mxu0 %v1209
        %v1277 = vpop.f32.mrf.mxu0
        %v1278 = vadd.f32 0.0, %v1277
        %v1279 = vpop.f32.mrf.mxu0
        %1280 = vdwg.mxu0
        %v1281 = vadd.f32 %v1202, %v1278
        %s1282 = scalar_lea.vmem %s3, 320
        %v1283 = vld [vmem:[%s1282] sm:$0xff]
        %v1284 = vld [vmem:[%s1282 + $0x8] sm:$0xff]
        %v1285 = vld [vmem:[%s1282 + $0x10] sm:$0xff]
        %v1286 = vld [vmem:[%s1282 + $0x18] sm:$0xff]
        %v1287 = vrot.slane %v491, 2
        %v1288 = vsel %vm505, %v1287, 0
        %1290 = vmatprep.subr.mxu0 0.0
        %1291 = vmatpush1.msra.mxu0 0.0
        %1292 = vmatprep.subr.mxu0 0.0
        %1293 = vmatpush1.msra.mxu0 0.0
        %1294 = vmatprep.subr.mxu0 0.0
        %1295 = vmatpush1.msra.mxu0 0.0
        %1296 = vmatprep.subr.mxu0 0.0
        %1297 = vmatpush1.msra.mxu0 0.0
        %1298 = vmatprep.subr.mxu0 0.0
        %1299 = vmatpush1.msra.mxu0 0.0
        %1300 = vmatprep.subr.mxu0 0.0
        %1301 = vmatpush1.msra.mxu0 0.0
        %1302 = vmatprep.subr.mxu0 0.0
        %1303 = vmatpush1.msra.mxu0 0.0
        %1304 = vmatprep.subr.mxu0 0.0
        %1305 = vmatpush1.msra.mxu0 0.0
        %1306 = vmatprep.subr.mxu0 0.0
        %1307 = vmatpush1.msra.mxu0 0.0
        %1308 = vmatprep.subr.mxu0 0.0
        %1309 = vmatpush1.msra.mxu0 0.0
        %1310 = vmatprep.subr.mxu0 0.0
        %1311 = vmatpush1.msra.mxu0 0.0
        %1312 = vmatprep.subr.mxu0 0.0
        %1313 = vmatpush1.msra.mxu0 0.0
        %1314 = vmatprep.subr.mxu0 0.0
        %1315 = vmatpush1.msra.mxu0 %v1286
        %1316 = vmatprep.subr.mxu0 0.0
        %1317 = vmatpush1.msra.mxu0 %v1285
        %1318 = vmatprep.subr.mxu0 0.0
        %1319 = vmatpush1.msra.mxu0 %v1284
        %1320 = vmatprep.subr.mxu0 0.0
        %1321 = vmatpush1.msra.mxu0 %v1283
        %1322 = vmatprep.subr.mxu0 0.0
        %1323 = vmatpush2.msra.mxu0 0.0
        %1324 = vmatprep.subr.mxu0 0.0
        %1325 = vmatpush2.msra.mxu0 0.0
        %1326 = vmatprep.subr.mxu0 0.0
        %1327 = vmatpush2.msra.mxu0 0.0
        %1328 = vmatprep.subr.mxu0 0.0
        %1329 = vmatpush2.msra.mxu0 0.0
        %1330 = vmatprep.subr.mxu0 0.0
        %1331 = vmatpush2.msra.mxu0 0.0
        %1332 = vmatprep.subr.mxu0 0.0
        %1333 = vmatpush2.msra.mxu0 0.0
        %1334 = vmatprep.subr.mxu0 0.0
        %1335 = vmatpush2.msra.mxu0 0.0
        %1336 = vmatprep.subr.mxu0 0.0
        %1337 = vmatpush2.msra.mxu0 0.0
        %1338 = vmatprep.subr.mxu0 0.0
        %1339 = vmatpush2.msra.mxu0 0.0
        %1340 = vmatprep.subr.mxu0 0.0
        %1341 = vmatpush2.msra.mxu0 0.0
        %1342 = vmatprep.subr.mxu0 0.0
        %1343 = vmatpush2.msra.mxu0 0.0
        %1344 = vmatprep.subr.mxu0 0.0
        %1345 = vmatpush2.msra.mxu0 0.0
        %1346 = vmatprep.subr.mxu0 0.0
        %1347 = vmatpush2.msra.mxu0 0.0
        %1348 = vmatprep.subr.mxu0 0.0
        %1349 = vmatpush2.msra.mxu0 0.0
        %1350 = vmatprep.subr.mxu0 0.0
        %1351 = vmatpush2.msra.mxu0 0.0
        %1352 = vmatprep.subr.mxu0 0.0
        %1353 = vmatpush2.msra.mxu0 0.0
        %1354 = vmatprep.mubr.f32.mxu0 0.0
        %1355 = vmatmul.mubr.f32.gmra.mxu0 %v1288
        %v1356 = vpop.f32.mrf.mxu0
        %v1357 = vadd.f32 0.0, %v1356
        %v1358 = vpop.f32.mrf.mxu0
        %1359 = vdwg.mxu0
        %v1360 = vadd.f32 %v1281, %v1357
        %s1361 = scalar_lea.vmem %s3, 352
        %v1362 = vld [vmem:[%s1361] sm:$0xff]
        %v1363 = vld [vmem:[%s1361 + $0x8] sm:$0xff]
        %v1364 = vld [vmem:[%s1361 + $0x10] sm:$0xff]
        %v1365 = vld [vmem:[%s1361 + $0x18] sm:$0xff]
        %v1366 = vrot.slane %v491, 3
        %v1367 = vsel %vm505, %v1366, 0
        %1369 = vmatprep.subr.mxu0 0.0
        %1370 = vmatpush1.msra.mxu0 0.0
        %1371 = vmatprep.subr.mxu0 0.0
        %1372 = vmatpush1.msra.mxu0 0.0
        %1373 = vmatprep.subr.mxu0 0.0
        %1374 = vmatpush1.msra.mxu0 0.0
        %1375 = vmatprep.subr.mxu0 0.0
        %1376 = vmatpush1.msra.mxu0 0.0
        %1377 = vmatprep.subr.mxu0 0.0
        %1378 = vmatpush1.msra.mxu0 0.0
        %1379 = vmatprep.subr.mxu0 0.0
        %1380 = vmatpush1.msra.mxu0 0.0
        %1381 = vmatprep.subr.mxu0 0.0
        %1382 = vmatpush1.msra.mxu0 0.0
        %1383 = vmatprep.subr.mxu0 0.0
        %1384 = vmatpush1.msra.mxu0 0.0
        %1385 = vmatprep.subr.mxu0 0.0
        %1386 = vmatpush1.msra.mxu0 0.0
        %1387 = vmatprep.subr.mxu0 0.0
        %1388 = vmatpush1.msra.mxu0 0.0
        %1389 = vmatprep.subr.mxu0 0.0
        %1390 = vmatpush1.msra.mxu0 0.0
        %1391 = vmatprep.subr.mxu0 0.0
        %1392 = vmatpush1.msra.mxu0 0.0
        %1393 = vmatprep.subr.mxu0 0.0
        %1394 = vmatpush1.msra.mxu0 %v1365
        %1395 = vmatprep.subr.mxu0 0.0
        %1396 = vmatpush1.msra.mxu0 %v1364
        %1397 = vmatprep.subr.mxu0 0.0
        %1398 = vmatpush1.msra.mxu0 %v1363
        %1399 = vmatprep.subr.mxu0 0.0
        %1400 = vmatpush1.msra.mxu0 %v1362
        %1401 = vmatprep.subr.mxu0 0.0
        %1402 = vmatpush2.msra.mxu0 0.0
        %1403 = vmatprep.subr.mxu0 0.0
        %1404 = vmatpush2.msra.mxu0 0.0
        %1405 = vmatprep.subr.mxu0 0.0
        %1406 = vmatpush2.msra.mxu0 0.0
        %1407 = vmatprep.subr.mxu0 0.0
        %1408 = vmatpush2.msra.mxu0 0.0
        %1409 = vmatprep.subr.mxu0 0.0
        %1410 = vmatpush2.msra.mxu0 0.0
        %1411 = vmatprep.subr.mxu0 0.0
        %1412 = vmatpush2.msra.mxu0 0.0
        %1413 = vmatprep.subr.mxu0 0.0
        %1414 = vmatpush2.msra.mxu0 0.0
        %1415 = vmatprep.subr.mxu0 0.0
        %1416 = vmatpush2.msra.mxu0 0.0
        %1417 = vmatprep.subr.mxu0 0.0
        %1418 = vmatpush2.msra.mxu0 0.0
        %1419 = vmatprep.subr.mxu0 0.0
        %1420 = vmatpush2.msra.mxu0 0.0
        %1421 = vmatprep.subr.mxu0 0.0
        %1422 = vmatpush2.msra.mxu0 0.0
        %1423 = vmatprep.subr.mxu0 0.0
        %1424 = vmatpush2.msra.mxu0 0.0
        %1425 = vmatprep.subr.mxu0 0.0
        %1426 = vmatpush2.msra.mxu0 0.0
        %1427 = vmatprep.subr.mxu0 0.0
        %1428 = vmatpush2.msra.mxu0 0.0
        %1429 = vmatprep.subr.mxu0 0.0
        %1430 = vmatpush2.msra.mxu0 0.0
        %1431 = vmatprep.subr.mxu0 0.0
        %1432 = vmatpush2.msra.mxu0 0.0
        %1433 = vmatprep.mubr.f32.mxu0 0.0
        %1434 = vmatmul.mubr.f32.gmra.mxu0 %v1367
        %v1435 = vpop.f32.mrf.mxu0
        %v1436 = vadd.f32 0.0, %v1435
        %v1437 = vpop.f32.mrf.mxu0
        %1438 = vdwg.mxu0
        %v1439 = vadd.f32 %v1360, %v1436
        %v1440 = vmul.f32 %v1439, 0.015625
        %v1441 = vld [vmem:[%s4] sm:$0xff]
        %v1442 = vld [vmem:[%s4 + $0x8] sm:$0xff]
        %v1443 = vld [vmem:[%s4 + $0x10] sm:$0xff]
        %v1444 = vld [vmem:[%s4 + $0x18] sm:$0xff]
        %v1445 = vld [vmem:[%s4 + $0x20] sm:$0xff]
        %v1446 = vld [vmem:[%s4 + $0x28] sm:$0xff]
        %v1447 = vld [vmem:[%s4 + $0x30] sm:$0xff]
        %v1448 = vld [vmem:[%s4 + $0x38] sm:$0xff]
        %v1449 = vld [vmem:[%s5] sm:$0x1]
        %vm1450 = vcmask 523264
        %v1452 = vsel %vm1450, %v1440, 0
        %1454 = vmatprep.subr.mxu0 0.0
        %1455 = vmatpush1.msra.mxu0 0.0
        %1456 = vmatprep.subr.mxu0 0.0
        %1457 = vmatpush1.msra.mxu0 0.0
        %1458 = vmatprep.subr.mxu0 0.0
        %1459 = vmatpush1.msra.mxu0 0.0
        %1460 = vmatprep.subr.mxu0 0.0
        %1461 = vmatpush1.msra.mxu0 0.0
        %1462 = vmatprep.subr.mxu0 0.0
        %1463 = vmatpush1.msra.mxu0 0.0
        %1464 = vmatprep.subr.mxu0 0.0
        %1465 = vmatpush1.msra.mxu0 0.0
        %1466 = vmatprep.subr.mxu0 0.0
        %1467 = vmatpush1.msra.mxu0 0.0
        %1468 = vmatprep.subr.mxu0 0.0
        %1469 = vmatpush1.msra.mxu0 0.0
        %1470 = vmatprep.subr.mxu0 0.0
        %1471 = vmatpush1.msra.mxu0 %v1448
        %1472 = vmatprep.subr.mxu0 0.0
        %1473 = vmatpush1.msra.mxu0 %v1447
        %1474 = vmatprep.subr.mxu0 0.0
        %1475 = vmatpush1.msra.mxu0 %v1446
        %1476 = vmatprep.subr.mxu0 0.0
        %1477 = vmatpush1.msra.mxu0 %v1445
        %1478 = vmatprep.subr.mxu0 0.0
        %1479 = vmatpush1.msra.mxu0 %v1444
        %1480 = vmatprep.subr.mxu0 0.0
        %1481 = vmatpush1.msra.mxu0 %v1443
        %1482 = vmatprep.subr.mxu0 0.0
        %1483 = vmatpush1.msra.mxu0 %v1442
        %1484 = vmatprep.subr.mxu0 0.0
        %1485 = vmatpush1.msra.mxu0 %v1441
        %1486 = vmatprep.subr.mxu0 0.0
        %1487 = vmatpush2.msra.mxu0 0.0
        %1488 = vmatprep.subr.mxu0 0.0
        %1489 = vmatpush2.msra.mxu0 0.0
        %1490 = vmatprep.subr.mxu0 0.0
        %1491 = vmatpush2.msra.mxu0 0.0
        %1492 = vmatprep.subr.mxu0 0.0
        %1493 = vmatpush2.msra.mxu0 0.0
        %1494 = vmatprep.subr.mxu0 0.0
        %1495 = vmatpush2.msra.mxu0 0.0
        %1496 = vmatprep.subr.mxu0 0.0
        %1497 = vmatpush2.msra.mxu0 0.0
        %1498 = vmatprep.subr.mxu0 0.0
        %1499 = vmatpush2.msra.mxu0 0.0
        %1500 = vmatprep.subr.mxu0 0.0
        %1501 = vmatpush2.msra.mxu0 0.0
        %1502 = vmatprep.subr.mxu0 0.0
        %1503 = vmatpush2.msra.mxu0 0.0
        %1504 = vmatprep.subr.mxu0 0.0
        %1505 = vmatpush2.msra.mxu0 0.0
        %1506 = vmatprep.subr.mxu0 0.0
        %1507 = vmatpush2.msra.mxu0 0.0
        %1508 = vmatprep.subr.mxu0 0.0
        %1509 = vmatpush2.msra.mxu0 0.0
        %1510 = vmatprep.subr.mxu0 0.0
        %1511 = vmatpush2.msra.mxu0 0.0
        %1512 = vmatprep.subr.mxu0 0.0
        %1513 = vmatpush2.msra.mxu0 0.0
        %1514 = vmatprep.subr.mxu0 0.0
        %1515 = vmatpush2.msra.mxu0 0.0
        %1516 = vmatprep.subr.mxu0 0.0
        %1517 = vmatpush2.msra.mxu0 0.0
        %1518 = vmatprep.mubr.f32.mxu0 0.0
        %1519 = vmatmul.mubr.f32.gmra.mxu0 %v1452
        %v1520 = vpop.f32.mrf.mxu0
        %v1521 = vadd.f32 %v1449, %v1520
        %v1522 = vpop.f32.mrf.mxu0
        %1523 = vdwg.mxu0
        %v1524 = vld [vmem:[%s6] sm:$0xff]
        %v1525 = vld [vmem:[%s6 + $0x8] sm:$0xff]
        %v1526 = vld [vmem:[%s6 + $0x10] sm:$0xff]
        %v1527 = vld [vmem:[%s6 + $0x18] sm:$0xff]
        %v1528 = vld [vmem:[%s6 + $0x20] sm:$0xff]
        %v1529 = vld [vmem:[%s6 + $0x28] sm:$0xff]
        %v1530 = vld [vmem:[%s6 + $0x30] sm:$0xff]
        %v1531 = vld [vmem:[%s6 + $0x38] sm:$0xff]
        %v1532 = vld [vmem:[%s6 + $0x40] sm:$0xff]
        %v1533 = vld [vmem:[%s6 + $0x48] sm:$0xff]
        %v1534 = vld [vmem:[%s6 + $0x50] sm:$0xff]
        %v1535 = vld [vmem:[%s6 + $0x58] sm:$0xff]
        %v1536 = vld [vmem:[%s6 + $0x60] sm:$0xff]
        %v1537 = vld [vmem:[%s6 + $0x68] sm:$0xff]
        %v1538 = vld [vmem:[%s6 + $0x70] sm:$0xff]
        %v1539 = vld [vmem:[%s6 + $0x78] sm:$0xff]
        %v1540 = vld [vmem:[%s397] sm:$0x1]
        %v1541 = vld [vmem:[%s7] sm:$0xff]
        %v1542 = vld [vmem:[%s7 + $0x8] sm:$0xff]
        %v1543 = vld [vmem:[%s7 + $0x10] sm:$0xff]
        %v1544 = vld [vmem:[%s7 + $0x18] sm:$0xff]
        %v1545 = vld [vmem:[%s7 + $0x20] sm:$0xff]
        %v1546 = vld [vmem:[%s7 + $0x28] sm:$0xff]
        %v1547 = vld [vmem:[%s7 + $0x30] sm:$0xff]
        %v1548 = vld [vmem:[%s7 + $0x38] sm:$0xff]
        %v1549 = vld [vmem:[%s7 + $0x40] sm:$0xff]
        %v1550 = vld [vmem:[%s7 + $0x48] sm:$0xff]
        %v1551 = vld [vmem:[%s7 + $0x50] sm:$0xff]
        %v1552 = vld [vmem:[%s7 + $0x58] sm:$0xff]
        %v1553 = vld [vmem:[%s7 + $0x60] sm:$0xff]
        %v1554 = vld [vmem:[%s7 + $0x68] sm:$0xff]
        %v1555 = vld [vmem:[%s7 + $0x70] sm:$0xff]
        %v1556 = vld [vmem:[%s7 + $0x78] sm:$0xff]
        %1557 = vmatprep.subr.mxu0 0.0
        %1558 = vmatpush1.msra.mxu0 %v1556
        %1559 = vmatprep.subr.mxu0 0.0
        %1560 = vmatpush1.msra.mxu0 %v1555
        %1561 = vmatprep.subr.mxu0 0.0
        %1562 = vmatpush1.msra.mxu0 %v1554
        %1563 = vmatprep.subr.mxu0 0.0
        %1564 = vmatpush1.msra.mxu0 %v1553
        %1565 = vmatprep.subr.mxu0 0.0
        %1566 = vmatpush1.msra.mxu0 %v1552
        %1567 = vmatprep.subr.mxu0 0.0
        %1568 = vmatpush1.msra.mxu0 %v1551
        %1569 = vmatprep.subr.mxu0 0.0
        %1570 = vmatpush1.msra.mxu0 %v1550
        %1571 = vmatprep.subr.mxu0 0.0
        %1572 = vmatpush1.msra.mxu0 %v1549
        %1573 = vmatprep.subr.mxu0 0.0
        %1574 = vmatpush1.msra.mxu0 %v1548
        %1575 = vmatprep.subr.mxu0 0.0
        %1576 = vmatpush1.msra.mxu0 %v1547
        %1577 = vmatprep.subr.mxu0 0.0
        %1578 = vmatpush1.msra.mxu0 %v1546
        %1579 = vmatprep.subr.mxu0 0.0
        %1580 = vmatpush1.msra.mxu0 %v1545
        %1581 = vmatprep.subr.mxu0 0.0
        %1582 = vmatpush1.msra.mxu0 %v1544
        %1583 = vmatprep.subr.mxu0 0.0
        %1584 = vmatpush1.msra.mxu0 %v1543
        %1585 = vmatprep.subr.mxu0 0.0
        %1586 = vmatpush1.msra.mxu0 %v1542
        %1587 = vmatprep.subr.mxu0 0.0
        %1588 = vmatpush1.msra.mxu0 %v1541
        %1589 = vmatprep.subr.mxu0 0.0
        %1590 = vmatpush2.msra.mxu0 0.0
        %1591 = vmatprep.subr.mxu0 0.0
        %1592 = vmatpush2.msra.mxu0 0.0
        %1593 = vmatprep.subr.mxu0 0.0
        %1594 = vmatpush2.msra.mxu0 0.0
        %1595 = vmatprep.subr.mxu0 0.0
        %1596 = vmatpush2.msra.mxu0 0.0
        %1597 = vmatprep.subr.mxu0 0.0
        %1598 = vmatpush2.msra.mxu0 0.0
        %1599 = vmatprep.subr.mxu0 0.0
        %1600 = vmatpush2.msra.mxu0 0.0
        %1601 = vmatprep.subr.mxu0 0.0
        %1602 = vmatpush2.msra.mxu0 0.0
        %1603 = vmatprep.subr.mxu0 0.0
        %1604 = vmatpush2.msra.mxu0 0.0
        %1605 = vmatprep.subr.mxu0 0.0
        %1606 = vmatpush2.msra.mxu0 0.0
        %1607 = vmatprep.subr.mxu0 0.0
        %1608 = vmatpush2.msra.mxu0 0.0
        %1609 = vmatprep.subr.mxu0 0.0
        %1610 = vmatpush2.msra.mxu0 0.0
        %1611 = vmatprep.subr.mxu0 0.0
        %1612 = vmatpush2.msra.mxu0 0.0
        %1613 = vmatprep.subr.mxu0 0.0
        %1614 = vmatpush2.msra.mxu0 0.0
        %1615 = vmatprep.subr.mxu0 0.0
        %1616 = vmatpush2.msra.mxu0 0.0
        %1617 = vmatprep.subr.mxu0 0.0
        %1618 = vmatpush2.msra.mxu0 0.0
        %1619 = vmatprep.subr.mxu0 0.0
        %1620 = vmatpush2.msra.mxu0 0.0
        %1621 = vmatprep.mubr.f32.mxu0 0.0
        %1622 = vmatmul.mubr.f32.gmra.mxu0 %v1540
        %v1623 = vpop.f32.mrf.mxu0
        %v1624 = vadd.f32 0.0, %v1623
        %v1625 = vpop.f32.mrf.mxu0
        %1626 = vdwg.mxu0
        %1627 = vmatprep.subr.mxu0 0.0
        %1628 = vmatpush1.msra.mxu0 %v1539
        %1629 = vmatprep.subr.mxu0 0.0
        %1630 = vmatpush1.msra.mxu0 %v1538
        %1631 = vmatprep.subr.mxu0 0.0
        %1632 = vmatpush1.msra.mxu0 %v1537
        %1633 = vmatprep.subr.mxu0 0.0
        %1634 = vmatpush1.msra.mxu0 %v1536
        %1635 = vmatprep.subr.mxu0 0.0
        %1636 = vmatpush1.msra.mxu0 %v1535
        %1637 = vmatprep.subr.mxu0 0.0
        %1638 = vmatpush1.msra.mxu0 %v1534
        %1639 = vmatprep.subr.mxu0 0.0
        %1640 = vmatpush1.msra.mxu0 %v1533
        %1641 = vmatprep.subr.mxu0 0.0
        %1642 = vmatpush1.msra.mxu0 %v1532
        %1643 = vmatprep.subr.mxu0 0.0
        %1644 = vmatpush1.msra.mxu0 %v1531
        %1645 = vmatprep.subr.mxu0 0.0
        %1646 = vmatpush1.msra.mxu0 %v1530
        %1647 = vmatprep.subr.mxu0 0.0
        %1648 = vmatpush1.msra.mxu0 %v1529
        %1649 = vmatprep.subr.mxu0 0.0
        %1650 = vmatpush1.msra.mxu0 %v1528
        %1651 = vmatprep.subr.mxu0 0.0
        %1652 = vmatpush1.msra.mxu0 %v1527
        %1653 = vmatprep.subr.mxu0 0.0
        %1654 = vmatpush1.msra.mxu0 %v1526
        %1655 = vmatprep.subr.mxu0 0.0
        %1656 = vmatpush1.msra.mxu0 %v1525
        %1657 = vmatprep.subr.mxu0 0.0
        %1658 = vmatpush1.msra.mxu0 %v1524
        %1659 = vmatprep.subr.mxu0 0.0
        %1660 = vmatpush2.msra.mxu0 0.0
        %1661 = vmatprep.subr.mxu0 0.0
        %1662 = vmatpush2.msra.mxu0 0.0
        %1663 = vmatprep.subr.mxu0 0.0
        %1664 = vmatpush2.msra.mxu0 0.0
        %1665 = vmatprep.subr.mxu0 0.0
        %1666 = vmatpush2.msra.mxu0 0.0
        %1667 = vmatprep.subr.mxu0 0.0
        %1668 = vmatpush2.msra.mxu0 0.0
        %1669 = vmatprep.subr.mxu0 0.0
        %1670 = vmatpush2.msra.mxu0 0.0
        %1671 = vmatprep.subr.mxu0 0.0
        %1672 = vmatpush2.msra.mxu0 0.0
        %1673 = vmatprep.subr.mxu0 0.0
        %1674 = vmatpush2.msra.mxu0 0.0
        %1675 = vmatprep.subr.mxu0 0.0
        %1676 = vmatpush2.msra.mxu0 0.0
        %1677 = vmatprep.subr.mxu0 0.0
        %1678 = vmatpush2.msra.mxu0 0.0
        %1679 = vmatprep.subr.mxu0 0.0
        %1680 = vmatpush2.msra.mxu0 0.0
        %1681 = vmatprep.subr.mxu0 0.0
        %1682 = vmatpush2.msra.mxu0 0.0
        %1683 = vmatprep.subr.mxu0 0.0
        %1684 = vmatpush2.msra.mxu0 0.0
        %1685 = vmatprep.subr.mxu0 0.0
        %1686 = vmatpush2.msra.mxu0 0.0
        %1687 = vmatprep.subr.mxu0 0.0
        %1688 = vmatpush2.msra.mxu0 0.0
        %1689 = vmatprep.subr.mxu0 0.0
        %1690 = vmatpush2.msra.mxu0 0.0
        %1691 = vmatprep.mubr.f32.mxu0 0.0
        %1692 = vmatmul.mubr.f32.gmra.mxu0 %v1521
        %v1693 = vpop.f32.mrf.mxu0
        %v1694 = vadd.f32 %v1624, %v1693
        %v1695 = vpop.f32.mrf.mxu0
        %1696 = vdwg.mxu0
        %v1697 = vld [vmem:[%s8] sm:$0x1]
        %v1698 = vadd.f32 %v1694, %v1697
        %v1699 = vmax.f32 %v1698, 0.0
        %v1700 = vld [vmem:[%s9] sm:$0xff]
        %v1701 = vld [vmem:[%s9 + $0x8] sm:$0xff]
        %v1702 = vld [vmem:[%s9 + $0x10] sm:$0xff]
        %v1703 = vld [vmem:[%s9 + $0x18] sm:$0xff]
        %v1704 = vld [vmem:[%s9 + $0x20] sm:$0xff]
        %v1705 = vld [vmem:[%s9 + $0x28] sm:$0xff]
        %v1706 = vld [vmem:[%s9 + $0x30] sm:$0xff]
        %v1707 = vld [vmem:[%s9 + $0x38] sm:$0xff]
        %v1708 = vld [vmem:[%s10] sm:$0x1]
        %v1710 = vsel %vm1450, %v1699, 0
        %1712 = vmatprep.subr.mxu0 0.0
        %1713 = vmatpush1.msra.mxu0 0.0
        %1714 = vmatprep.subr.mxu0 0.0
        %1715 = vmatpush1.msra.mxu0 0.0
        %1716 = vmatprep.subr.mxu0 0.0
        %1717 = vmatpush1.msra.mxu0 0.0
        %1718 = vmatprep.subr.mxu0 0.0
        %1719 = vmatpush1.msra.mxu0 0.0
        %1720 = vmatprep.subr.mxu0 0.0
        %1721 = vmatpush1.msra.mxu0 0.0
        %1722 = vmatprep.subr.mxu0 0.0
        %1723 = vmatpush1.msra.mxu0 0.0
        %1724 = vmatprep.subr.mxu0 0.0
        %1725 = vmatpush1.msra.mxu0 0.0
        %1726 = vmatprep.subr.mxu0 0.0
        %1727 = vmatpush1.msra.mxu0 0.0
        %1728 = vmatprep.subr.mxu0 0.0
        %1729 = vmatpush1.msra.mxu0 %v1707
        %1730 = vmatprep.subr.mxu0 0.0
        %1731 = vmatpush1.msra.mxu0 %v1706
        %1732 = vmatprep.subr.mxu0 0.0
        %1733 = vmatpush1.msra.mxu0 %v1705
        %1734 = vmatprep.subr.mxu0 0.0
        %1735 = vmatpush1.msra.mxu0 %v1704
        %1736 = vmatprep.subr.mxu0 0.0
        %1737 = vmatpush1.msra.mxu0 %v1703
        %1738 = vmatprep.subr.mxu0 0.0
        %1739 = vmatpush1.msra.mxu0 %v1702
        %1740 = vmatprep.subr.mxu0 0.0
        %1741 = vmatpush1.msra.mxu0 %v1701
        %1742 = vmatprep.subr.mxu0 0.0
        %1743 = vmatpush1.msra.mxu0 %v1700
        %1744 = vmatprep.subr.mxu0 0.0
        %1745 = vmatpush2.msra.mxu0 0.0
        %1746 = vmatprep.subr.mxu0 0.0
        %1747 = vmatpush2.msra.mxu0 0.0
        %1748 = vmatprep.subr.mxu0 0.0
        %1749 = vmatpush2.msra.mxu0 0.0
        %1750 = vmatprep.subr.mxu0 0.0
        %1751 = vmatpush2.msra.mxu0 0.0
        %1752 = vmatprep.subr.mxu0 0.0
        %1753 = vmatpush2.msra.mxu0 0.0
        %1754 = vmatprep.subr.mxu0 0.0
        %1755 = vmatpush2.msra.mxu0 0.0
        %1756 = vmatprep.subr.mxu0 0.0
        %1757 = vmatpush2.msra.mxu0 0.0
        %1758 = vmatprep.subr.mxu0 0.0
        %1759 = vmatpush2.msra.mxu0 0.0
        %1760 = vmatprep.subr.mxu0 0.0
        %1761 = vmatpush2.msra.mxu0 0.0
        %1762 = vmatprep.subr.mxu0 0.0
        %1763 = vmatpush2.msra.mxu0 0.0
        %1764 = vmatprep.subr.mxu0 0.0
        %1765 = vmatpush2.msra.mxu0 0.0
        %1766 = vmatprep.subr.mxu0 0.0
        %1767 = vmatpush2.msra.mxu0 0.0
        %1768 = vmatprep.subr.mxu0 0.0
        %1769 = vmatpush2.msra.mxu0 0.0
        %1770 = vmatprep.subr.mxu0 0.0
        %1771 = vmatpush2.msra.mxu0 0.0
        %1772 = vmatprep.subr.mxu0 0.0
        %1773 = vmatpush2.msra.mxu0 0.0
        %1774 = vmatprep.subr.mxu0 0.0
        %1775 = vmatpush2.msra.mxu0 0.0
        %1776 = vmatprep.mubr.f32.mxu0 0.0
        %1777 = vmatmul.mubr.f32.gmra.mxu0 %v1710
        %v1778 = vpop.f32.mrf.mxu0
        %v1779 = vadd.f32 %v1708, %v1778
        %v1780 = vpop.f32.mrf.mxu0
        %1781 = vdwg.mxu0
        %1782 = vst [vmem:[%s389] sm:$0x1] %v1779
        %s1783 = sand.u32 %s274, 1
        %s1784 = scalar_lea.sflag [#allocation3], %s1783
        %s1785 = sand.u32 %s274, 1
        %s1786 = scalar_lea.vmem [#allocation2], %s1785
        // Predicated region
        $region65: #{tpu_custom_call.1} parent=63 // pred_check
          %p1787 = pneg %p284
        $region66: #{tpu_custom_call.1} parent=63 // pred_check_branch
          %1789 = sbr.rel (%p1787) target = $region68
        $region67: #{tpu_custom_call.1} parent=63 // pred_region
          %s1791 = ssub.s32 16, 16
          %1792 = vsyncadd %s1784, %s1791
          %s1793 = smul.addr %s25, 16
          %s1794 = scalar_lea.hbm %s11, %s1793
          %s1796 = sshll.u32 %s1786, 4
          %s1797 = int_to_ptr.vmem [resolvable:$true] %s1796
          %1799 = dma.vmem_to_hbm [thread:$0]  %s1797, 16, %s1794, %s1784
        $region68: #{tpu_custom_call.1} parent=63 // pred_fallthru
          _
      $region64: #{tpu_custom_call.1} parent=5 // pred_fallthru
        _
      %p1800 = scmp.le.s32.totalorder 2, %s20
      // Predicated region
      $region69: #{tpu_custom_call.1} parent=5 // pred_check
        %p1801 = pneg %p1800
      $region70: #{tpu_custom_call.1} parent=5 // pred_check_branch
        %1803 = sbr.rel (%p1801) target = $region72
      $region71: #{tpu_custom_call.1} parent=5 // pred_region
        %s1804 = ssub.s32 %s20, 2
        // Predicated region
        $region73: #{tpu_custom_call.1} parent=71 // pred_check
          %p1805 = pneg %p290
        $region74: #{tpu_custom_call.1} parent=71 // pred_check_branch
          %1807 = sbr.rel (%p1805) target = $region76
        $region75: #{tpu_custom_call.1} parent=71 // pred_region
          %s1808 = sand.u32 %s275, 1
          %s1809 = scalar_lea.sflag [#allocation3], %s1808
          %s1810 = sand.u32 %s275, 1
          %s1811 = scalar_lea.vmem [#allocation2], %s1810
          %1812 = dma.done %s1809, 16
        $region76: #{tpu_custom_call.1} parent=71 // pred_fallthru
          _
      $region72: #{tpu_custom_call.1} parent=5 // pred_fallthru
        _
    $region6: #{tpu_custom_call.1} parent=1 // loop_footer
      %s24 = sadd.s32 1, %s20
    $region7: #{tpu_custom_call.1} parent=1 // loop_footer_branch
      %19 = sbr.rel target = $region3
    $region8: #{tpu_custom_call.1} parent=1 // loop_exit
      _
    %1813 = vsyncpa [#allocation3], 1
    %s1814 = scalar_lea.sflag [#allocation3], 1
    %1815 = vsyncpa %s1814, 1

</llo_original>
